<compile_context>
chip_gen: v7x
topology: tpu7x:2x2x1
jax: 0.10.0
libtpu: 0.0.40
codegen_flags: <defaults>
</compile_context>

<pallas_src>
import jax
import jax.numpy as jnp
import numpy as np
from functools import partial
from jax.experimental import pallas as pl
from jax.experimental.pallas import tpu as pltpu


def _gnn_kernel(n_nodes,
                A_ref, X_ref, AD_ref,
                Wn_ref, bn_ref, We_ref, be_ref,
                W1_ref, b1_ref, W2_ref, b2_ref, Wl_ref,
                eps_ref, bl_ref,
                out_ref,
                h_scr, et_scr):
    l = pl.program_id(1)
    n_layers = pl.num_programs(1)
    G, Np, _ = A_ref.shape
    Hp = Wn_ref.shape[1]
    bf16 = jnp.bfloat16
    f32 = jnp.float32

    # ---------- first layer step for this batch tile: build Hcur and edge_term ----------
    @pl.when(l == 0)
    def _init():
        # Initial node projection as one lane-dense (G*Np, Fp) @ (Fp, Hp) MXU matmul.
        Xf = X_ref[...].reshape(G * Np, -1)                       # already bf16
        h0 = jnp.dot(Xf, Wn_ref[...],
                     preferred_element_type=f32) + bn_ref[...]
        h_scr[...] = h0.reshape(G, Np, Hp)

        # Linear(1,H) edge embedding aggregated with A factorizes exactly:
        #   sum_j A_ij*(We*E_ij + be) = (sum_j A_ij*E_ij)*We + (sum_j A_ij)*be
        AD = AD_ref[...]                 # (G, 2, Np) f32: row 0 = sum_j A*E, row 1 = deg
        AE = AD[:, 0, :]
        deg = AD[:, 1, :]
        et_scr[...] = (AE[:, :, None] * We_ref[...].reshape(1, 1, Hp)
                       + deg[:, :, None] * be_ref[...].reshape(1, 1, Hp))

    # ---------- GIN layer l (this layer's weights are streamed in via BlockSpec) ----------
    scale = 1.0 + eps_ref[l]                               # scalar from SMEM
    Hcur = h_scr[...]                                      # (G, Np, Hp) f32
    agg = jnp.einsum('gij,gjh->gih',
                     A_ref[...], Hcur.astype(bf16),        # A already bf16
                     preferred_element_type=f32)
    h = (Hcur * scale + agg + et_scr[...]).reshape(G * Np, Hp)
    h = jnp.dot(h.astype(bf16), W1_ref[0],
                preferred_element_type=f32) + b1_ref[0]
    h = jnp.maximum(h, 0.0)
    h = jnp.dot(h.astype(bf16), W2_ref[0],
                preferred_element_type=f32) + b2_ref[0]
    h_scr[...] = h.reshape(G, Np, Hp)

    # ---------- readout after the last layer ----------
    @pl.when(l == n_layers - 1)
    def _final():
        Hc = h_scr[...]
        # Mask padded nodes so the mean is over the true node count.
        node_id = jax.lax.broadcasted_iota(jnp.int32, (1, Np, 1), 1)
        mask = (node_id < n_nodes).astype(f32)
        pooled = jnp.sum(Hc * mask, axis=1) * (1.0 / n_nodes)                  # (G, Hp)
        logit = jnp.sum(pooled * Wl_ref[...], axis=-1, keepdims=True) + bl_ref[0]  # (G, 1)
        out = 1.0 + jnp.where(logit >= 0.0, logit, 0.01 * logit)               # 1 + LeakyReLU
        out_ref[...] = jnp.broadcast_to(out[:, :, None], out_ref.shape).astype(out_ref.dtype)


def _round_up(x, m):
    return (x + m - 1) // m * m


def _pad_to(x, shape):
    return jnp.pad(x, [(0, t - s) for s, t in zip(x.shape, shape)])


def _choose_graphs_per_tile(B, Np, Fp, Hp):
    """Pick graphs/tile so the flattened (G*Np, Hp) matmuls approach 128 rows while the
    per-tile VMEM footprint (double-buffered inputs + persistent scratch) stays modest."""
    g = max(1, 128 // Np)

    def tile_bytes(g):
        a = 2 * g * Np * Np * 2          # A (bf16), double-buffered
        x = 2 * g * Np * Fp * 2          # X (bf16)
        ad = 2 * g * 2 * Np * 4          # [AE ; deg] (f32)
        scr = 2 * g * Np * Hp * 4        # Hcur + edge_term scratch (f32)
        return a + x + ad + scr

    budget = 20 * 1024 * 1024            # leave room for streamed (Hp,Hp) weights
    while g > 1 and tile_bytes(g) > budget:
        g //= 2
    return max(1, min(g, B))


def gnn_forward(A, X, E, params, n_layers, graphs_per_tile=None):
    """A:[B,N,N], X:[B,N,5], E:[B,N,N,1] -> [B,1]."""
    B, N, _ = A.shape
    F = X.shape[-1]
    H = params['Wn'].shape[-1]

    Hp = _round_up(H, 128)        # lane-dense hidden dim
    Fp = _round_up(F, 8)
    Np = _round_up(N, 8)          # pad to 128 for production-sized graphs
    G = graphs_per_tile if graphs_per_tile is not None else _choose_graphs_per_tile(B, Np, Fp, Hp)
    Bp = _round_up(B, G)
    n_tiles = Bp // G

    bf16 = jnp.bfloat16

    # E only enters through these reductions -> keep E out of the kernel entirely.
    E2 = E[..., 0]
    AE = jnp.sum(A * E2, axis=-1)                 # (B, N)  f32
    deg = jnp.sum(A, axis=-1)                     # (B, N)  f32
    AD = jnp.stack([AE, deg], axis=1)             # (B, 2, N)

    # MXU operands pre-cast to bf16 (halves DMA bytes); everything added stays f32.
    A_p = _pad_to(A, (Bp, Np, Np)).astype(bf16)
    X_p = _pad_to(X, (Bp, Np, Fp)).astype(bf16)
    AD_p = _pad_to(AD, (Bp, 2, Np))

    Wn = _pad_to(params['Wn'], (Fp, Hp)).astype(bf16)
    bn = _pad_to(params['bn'], (1, Hp))
    We = _pad_to(params['We'], (1, Hp))
    be = _pad_to(params['be'], (1, Hp))
    W1 = _pad_to(params['W1'], (n_layers, Hp, Hp)).astype(bf16)
    b1 = _pad_to(params['b1'], (n_layers, 1, Hp))
    W2 = _pad_to(params['W2'], (n_layers, Hp, Hp)).astype(bf16)
    b2 = _pad_to(params['b2'], (n_layers, 1, Hp))
    Wl = _pad_to(params['Wl'].reshape(1, H), (1, Hp))     # row vector (lane-dense)
    eps = params['eps'].reshape(n_layers).astype(jnp.float32)
    bl = params['bl'].reshape(1).astype(jnp.float32)

    batch_map = lambda i, l: (i, 0, 0)
    const2 = lambda i, l: (0, 0)
    layer3 = lambda i, l: (l, 0, 0)
    smem = pl.BlockSpec(memory_space=pltpu.MemorySpace.SMEM)

    out = pl.pallas_call(
        partial(_gnn_kernel, N),
        out_shape=jax.ShapeDtypeStruct((Bp, 1, 128), jnp.float32),
        grid=(n_tiles, n_layers),
        in_specs=[
            pl.BlockSpec((G, Np, Np), batch_map),         # A (bf16)
            pl.BlockSpec((G, Np, Fp), batch_map),         # X (bf16)
            pl.BlockSpec((G, 2, Np),  batch_map),         # [AE ; deg] (f32)
            pl.BlockSpec((Fp, Hp),    const2),            # Wn
            pl.BlockSpec((1, Hp),     const2),            # bn
            pl.BlockSpec((1, Hp),     const2),            # We
            pl.BlockSpec((1, Hp),     const2),            # be
            pl.BlockSpec((1, Hp, Hp), layer3),            # W1 streamed per layer
            pl.BlockSpec((1, 1, Hp),  layer3),            # b1
            pl.BlockSpec((1, Hp, Hp), layer3),            # W2 streamed per layer
            pl.BlockSpec((1, 1, Hp),  layer3),            # b2
            pl.BlockSpec((1, Hp),     const2),            # Wl (row)
            smem,                                         # eps (L,)
            smem,                                         # bl  (1,)
        ],
        out_specs=pl.BlockSpec((G, 1, 128), batch_map),
        scratch_shapes=[
            pltpu.VMEM((G, Np, Hp), jnp.float32),         # Hcur carried across layer steps
            pltpu.VMEM((G, Np, Hp), jnp.float32),         # edge_term
        ],
        compiler_params=pltpu.CompilerParams(
            dimension_semantics=("parallel", "arbitrary"),
            vmem_limit_bytes=32 * 1024 * 1024,
        ),
    )(A_p, X_p, AD_p, Wn, bn, We, be, W1, b1, W2, b2, Wl, eps, bl)

    return out[:B, 0, 0:1]


def _reference_forward(A, X, E, params, n_layers):
    """Pure-JAX reference with the same GIN assumption and the same matmul precision
    as the kernel (bf16 MXU operands, f32 accumulation); edge path kept in f32."""
    bf16 = jnp.bfloat16
    mm = lambda eq, a, b: jnp.einsum(eq, a.astype(bf16), b.astype(bf16),
                                     preferred_element_type=jnp.float32)
    E2 = E[..., 0]
    Hcur = mm('bnf,fh->bnh', X, params['Wn']) + params['bn']
    # Un-factorized edge aggregation (validates the kernel's exact factorization).
    Eproj = (E2[..., None] * params['We'].reshape(1, 1, 1, -1)
             + params['be'].reshape(1, 1, 1, -1))
    edge_term = jnp.einsum('bij,bijh->bih', A, Eproj)
    for l in range(n_layers):
        agg = mm('bij,bjh->bih', A, Hcur)
        h = (1.0 + params['eps'][l, 0]) * Hcur + agg + edge_term
        h = jnp.maximum(mm('bnh,hk->bnk', h, params['W1'][l]) + params['b1'][l], 0.0)
        h = mm('bnh,hk->bnk', h, params['W2'][l]) + params['b2'][l]
        Hcur = h
    pooled = jnp.mean(Hcur, axis=1)
    out = pooled @ params['Wl'] + params['bl']
    return 1.0 + jnp.where(out >= 0.0, out, 0.01 * out)


def init_params(key, node_size, n_layers):
    H = node_size
    ks = jax.random.split(key, 12)
    u = lambda k, shape, s: jax.random.uniform(k, shape, jnp.float32, -s, s)
    return {
        # Linear(1, H)
        'We': u(ks[0], (1, H), 1.0),
        'be': u(ks[1], (1, H), 1.0),
        # Linear(5, H)
        'Wn': u(ks[2], (5, H), 1.0 / np.sqrt(5.0)),
        'bn': u(ks[3], (1, H), 1.0 / np.sqrt(5.0)),
        # GIN conv MLPs (stacked over layers), eps init 0
        'eps': jnp.zeros((n_layers, 1), jnp.float32),
        'W1': u(ks[4], (n_layers, H, H), 1.0 / np.sqrt(H)),
        'b1': u(ks[5], (n_layers, 1, H), 1.0 / np.sqrt(H)),
        'W2': u(ks[6], (n_layers, H, H), 1.0 / np.sqrt(H)),
        'b2': u(ks[7], (n_layers, 1, H), 1.0 / np.sqrt(H)),
        # Linear(H, 1), xavier_uniform for weight
        'Wl': u(ks[8], (H, 1), np.sqrt(6.0 / (H + 1))),
        'bl': u(ks[9], (1, 1), 1.0 / np.sqrt(H)),
    }


if __name__ == "__main__":
    B, N, F, H, L = 2, 16, 5, 32, 2

    key = jax.random.PRNGKey(0)
    k_a, k_x, k_e, k_p = jax.random.split(key, 4)

    A = (jax.random.uniform(k_a, (B, N, N)) < 0.3).astype(jnp.float32)
    X = jax.random.normal(k_x, (B, N, F), jnp.float32)
    E = jax.random.normal(k_e, (B, N, N, 1), jnp.float32)
    params = init_params(k_p, H, L)

    out = jax.block_until_ready(gnn_forward(A, X, E, params, L))
    ref = jax.block_until_ready(_reference_forward(A, X, E, params, L))

    assert out.shape == (B, 1) and out.dtype == jnp.float32
    # bf16 MXU operands with f32 accumulation in both kernel and reference.
    np.testing.assert_allclose(np.asarray(out), np.asarray(ref), rtol=1e-2, atol=1e-2)

    print("KERNEL_OK")
</pallas_src>

<mosaic_0001>
module attributes {stable_mosaic.version = 11 : i64} {
  func.func @_gnn_kernel(%arg0: i32, %arg1: i32, %arg2: memref<2x16x16xbf16, #tpu.memory_space<vmem>>, %arg3: memref<2x16x8xbf16, #tpu.memory_space<vmem>>, %arg4: memref<2x2x16xf32, #tpu.memory_space<vmem>>, %arg5: memref<8x128xbf16, #tpu.memory_space<vmem>>, %arg6: memref<1x128xf32, #tpu.memory_space<vmem>>, %arg7: memref<1x128xf32, #tpu.memory_space<vmem>>, %arg8: memref<1x128xf32, #tpu.memory_space<vmem>>, %arg9: memref<1x128x128xbf16, #tpu.memory_space<vmem>>, %arg10: memref<1x1x128xf32, #tpu.memory_space<vmem>>, %arg11: memref<1x128x128xbf16, #tpu.memory_space<vmem>>, %arg12: memref<1x1x128xf32, #tpu.memory_space<vmem>>, %arg13: memref<1x128xf32, #tpu.memory_space<vmem>>, %arg14: memref<2xf32, #tpu.memory_space<smem>>, %arg15: memref<1xf32, #tpu.memory_space<smem>>, %arg16: memref<2x1x128xf32, #tpu.memory_space<vmem>>, %arg17: memref<2x16x128xf32, #tpu.memory_space<vmem>>, %arg18: memref<2x16x128xf32, #tpu.memory_space<vmem>>) attributes {dimension_semantics = [#tpu.dimension_semantics<parallel>, #tpu.dimension_semantics<arbitrary>], iteration_bounds = array<i64: 1, 2>, scalar_prefetch = 0 : i64, scratch_operands = 2 : i64, tpu.core_type = #tpu.core_type<tc>, window_params = [{transform_indices = @transform_0, window_bounds = array<i64: 2, 16, 16>}, {transform_indices = @transform_1, window_bounds = array<i64: 2, 16, 8>}, {transform_indices = @transform_2, window_bounds = array<i64: 2, 2, 16>}, {pipeline_mode = #tpu.pipeline_mode<synchronous>, transform_indices = @transform_3, window_bounds = array<i64: 8, 128>}, {pipeline_mode = #tpu.pipeline_mode<synchronous>, transform_indices = @transform_4, window_bounds = array<i64: 1, 128>}, {pipeline_mode = #tpu.pipeline_mode<synchronous>, transform_indices = @transform_5, window_bounds = array<i64: 1, 128>}, {pipeline_mode = #tpu.pipeline_mode<synchronous>, transform_indices = @transform_6, window_bounds = array<i64: 1, 128>}, {transform_indices = @transform_7, window_bounds = array<i64: 1, 128, 128>}, {transform_indices = @transform_8, window_bounds = array<i64: 1, 1, 128>}, {transform_indices = @transform_9, window_bounds = array<i64: 1, 128, 128>}, {transform_indices = @transform_10, window_bounds = array<i64: 1, 1, 128>}, {pipeline_mode = #tpu.pipeline_mode<synchronous>, transform_indices = @transform_11, window_bounds = array<i64: 1, 128>}, {transform_indices = @transform_12, window_bounds = array<i64: 2>}, {transform_indices = @transform_13, window_bounds = array<i64: 1>}, {transform_indices = @transform_14, window_bounds = array<i64: 2, 1, 128>}]} {
    %c0_i32 = arith.constant 0 : i32
    %0 = arith.cmpi eq, %arg1, %c0_i32 : i32
    %1 = arith.extui %0 : i1 to i32
    %c0_i32_0 = arith.constant 0 : i32
    %2 = arith.cmpi ne, %1, %c0_i32_0 : i32
    scf.if %2 {
      %c0_29 = arith.constant 0 : index
      %c0_30 = arith.constant 0 : index
      %c0_31 = arith.constant 0 : index
      %39 = vector.load %arg3[%c0_29, %c0_30, %c0_31] : memref<2x16x8xbf16, #tpu.memory_space<vmem>>, vector<2x16x8xbf16>
      %40 = vector.shape_cast %39 : vector<2x16x8xbf16> to vector<32x8xbf16>
      %c0_32 = arith.constant 0 : index
      %c0_33 = arith.constant 0 : index
      %41 = vector.load %arg5[%c0_32, %c0_33] : memref<8x128xbf16, #tpu.memory_space<vmem>>, vector<8x128xbf16>
      %cst_34 = arith.constant dense<0.000000e+00> : vector<32x128xf32>
      %42 = tpu.matmul %40, %41, %cst_34 {dimension_numbers = #tpu.dot_dimension_numbers<[1], [0], [0], [1], [0, 0, 1, 1], [], []>} : vector<32x8xbf16>, vector<8x128xbf16>, vector<32x128xf32> -> vector<32x128xf32>
      %c0_35 = arith.constant 0 : index
      %c0_36 = arith.constant 0 : index
      %43 = vector.load %arg6[%c0_35, %c0_36] : memref<1x128xf32, #tpu.memory_space<vmem>>, vector<1x128xf32>
      %44 = vector.broadcast %43 : vector<1x128xf32> to vector<32x128xf32>
      %45 = arith.addf %42, %44 : vector<32x128xf32>
      %46 = vector.shape_cast %45 : vector<32x128xf32> to vector<2x16x128xf32>
      %c0_37 = arith.constant 0 : index
      %c0_38 = arith.constant 0 : index
      %c0_39 = arith.constant 0 : index
      %47 = vector.load %arg17[%c0_37, %c0_38, %c0_39] : memref<2x16x128xf32, #tpu.memory_space<vmem>>, vector<2x16x128xf32>
      tpu.vector_store %arg17[%c0_37, %c0_38, %c0_39], %46 {strides = array<i32>} : memref<2x16x128xf32, #tpu.memory_space<vmem>>, vector<2x16x128xf32>,
      %c0_40 = arith.constant 0 : index
      %c0_41 = arith.constant 0 : index
      %c0_42 = arith.constant 0 : index
      %48 = vector.load %arg4[%c0_40, %c0_41, %c0_42] : memref<2x2x16xf32, #tpu.memory_space<vmem>>, vector<2x2x16xf32>
      %49 = vector.extract_strided_slice %48 {offsets = [0, 0, 0], sizes = [2, 1, 16], strides = [1, 1, 1]} : vector<2x2x16xf32> to vector<2x1x16xf32>
      %50 = vector.shape_cast %49 : vector<2x1x16xf32> to vector<2x16xf32>
      %51 = vector.extract_strided_slice %48 {offsets = [0, 1, 0], sizes = [2, 1, 16], strides = [1, 1, 1]} : vector<2x2x16xf32> to vector<2x1x16xf32>
      %52 = vector.shape_cast %51 : vector<2x1x16xf32> to vector<2x16xf32>
      %53 = vector.shape_cast %50 : vector<2x16xf32> to vector<2x16x1xf32>
      %c0_43 = arith.constant 0 : index
      %c0_44 = arith.constant 0 : index
      %54 = vector.load %arg7[%c0_43, %c0_44] : memref<1x128xf32, #tpu.memory_space<vmem>>, vector<1x128xf32>
      %55 = vector.shape_cast %54 : vector<1x128xf32> to vector<1x1x128xf32>
      %56 = vector.broadcast %53 : vector<2x16x1xf32> to vector<2x16x128xf32>
      %57 = vector.broadcast %55 : vector<1x1x128xf32> to vector<2x16x128xf32>
      %58 = arith.mulf %56, %57 : vector<2x16x128xf32>
      %59 = vector.shape_cast %52 : vector<2x16xf32> to vector<2x16x1xf32>
      %c0_45 = arith.constant 0 : index
      %c0_46 = arith.constant 0 : index
      %60 = vector.load %arg8[%c0_45, %c0_46] : memref<1x128xf32, #tpu.memory_space<vmem>>, vector<1x128xf32>
      %61 = vector.shape_cast %60 : vector<1x128xf32> to vector<1x1x128xf32>
      %62 = vector.broadcast %59 : vector<2x16x1xf32> to vector<2x16x128xf32>
      %63 = vector.broadcast %61 : vector<1x1x128xf32> to vector<2x16x128xf32>
      %64 = arith.mulf %62, %63 : vector<2x16x128xf32>
      %65 = arith.addf %58, %64 : vector<2x16x128xf32>
      %c0_47 = arith.constant 0 : index
      %c0_48 = arith.constant 0 : index
      %c0_49 = arith.constant 0 : index
      %66 = vector.load %arg18[%c0_47, %c0_48, %c0_49] : memref<2x16x128xf32, #tpu.memory_space<vmem>>, vector<2x16x128xf32>
      tpu.vector_store %arg18[%c0_47, %c0_48, %c0_49], %65 {strides = array<i32>} : memref<2x16x128xf32, #tpu.memory_space<vmem>>, vector<2x16x128xf32>,
    } else {
    }
    %3 = arith.index_cast %arg1 : i32 to index
    %4 = memref.load %arg14[%3] : memref<2xf32, #tpu.memory_space<smem>>
    %cst = arith.constant 1.000000e+00 : f32
    %5 = arith.addf %cst, %4 : f32
    %c0 = arith.constant 0 : index
    %c0_1 = arith.constant 0 : index
    %c0_2 = arith.constant 0 : index
    %6 = vector.load %arg17[%c0, %c0_1, %c0_2] : memref<2x16x128xf32, #tpu.memory_space<vmem>>, vector<2x16x128xf32>
    %c0_3 = arith.constant 0 : index
    %c0_4 = arith.constant 0 : index
    %c0_5 = arith.constant 0 : index
    %7 = vector.load %arg2[%c0_3, %c0_4, %c0_5] : memref<2x16x16xbf16, #tpu.memory_space<vmem>>, vector<2x16x16xbf16>
    %8 = arith.truncf %6 : vector<2x16x128xf32> to vector<2x16x128xbf16>
    "tpu.trace_start"() <{level = 10 : i32, message = "gij,gjh->gih"}> : () -> ()
    %cst_6 = arith.constant dense<0.000000e+00> : vector<2x16x128xf32>
    %9 = tpu.matmul %7, %8, %cst_6 {dimension_numbers = #tpu.dot_dimension_numbers<[2], [1], [1], [2], [0, 0, 0, 1, 1, 2], [0], [0]>} : vector<2x16x16xbf16>, vector<2x16x128xbf16>, vector<2x16x128xf32> -> vector<2x16x128xf32>
    "tpu.trace_stop"() : () -> ()
    %10 = vector.broadcast %5 : f32 to vector<2x16x128xf32>
    %11 = arith.mulf %6, %10 : vector<2x16x128xf32>
    %12 = arith.addf %11, %9 : vector<2x16x128xf32>
    %c0_7 = arith.constant 0 : index
    %c0_8 = arith.constant 0 : index
    %c0_9 = arith.constant 0 : index
    %13 = vector.load %arg18[%c0_7, %c0_8, %c0_9] : memref<2x16x128xf32, #tpu.memory_space<vmem>>, vector<2x16x128xf32>
    %14 = arith.addf %12, %13 : vector<2x16x128xf32>
    %15 = vector.shape_cast %14 : vector<2x16x128xf32> to vector<32x128xf32>
    %16 = arith.truncf %15 : vector<32x128xf32> to vector<32x128xbf16>
    %c0_10 = arith.constant 0 : index
    %c0_11 = arith.constant 0 : index
    %c0_12 = arith.constant 0 : index
    %17 = vector.load %arg9[%c0_10, %c0_11, %c0_12] : memref<1x128x128xbf16, #tpu.memory_space<vmem>>, vector<1x128x128xbf16>
    %18 = vector.shape_cast %17 : vector<1x128x128xbf16> to vector<128x128xbf16>
    %cst_13 = arith.constant dense<0.000000e+00> : vector<32x128xf32>
    %19 = tpu.matmul %16, %18, %cst_13 {dimension_numbers = #tpu.dot_dimension_numbers<[1], [0], [0], [1], [0, 0, 1, 1], [], []>} : vector<32x128xbf16>, vector<128x128xbf16>, vector<32x128xf32> -> vector<32x128xf32>
    %c0_14 = arith.constant 0 : index
    %c0_15 = arith.constant 0 : index
    %c0_16 = arith.constant 0 : index
    %20 = vector.load %arg10[%c0_14, %c0_15, %c0_16] : memref<1x1x128xf32, #tpu.memory_space<vmem>>, vector<1x1x128xf32>
    %21 = vector.shape_cast %20 : vector<1x1x128xf32> to vector<1x128xf32>
    %22 = vector.broadcast %21 : vector<1x128xf32> to vector<32x128xf32>
    %23 = arith.addf %19, %22 : vector<32x128xf32>
    %cst_17 = arith.constant 0.000000e+00 : f32
    %24 = vector.broadcast %cst_17 : f32 to vector<32x128xf32>
    %25 = arith.maximumf %23, %24 : vector<32x128xf32>
    %26 = arith.truncf %25 : vector<32x128xf32> to vector<32x128xbf16>
    %c0_18 = arith.constant 0 : index
    %c0_19 = arith.constant 0 : index
    %c0_20 = arith.constant 0 : index
    %27 = vector.load %arg11[%c0_18, %c0_19, %c0_20] : memref<1x128x128xbf16, #tpu.memory_space<vmem>>, vector<1x128x128xbf16>
    %28 = vector.shape_cast %27 : vector<1x128x128xbf16> to vector<128x128xbf16>
    %cst_21 = arith.constant dense<0.000000e+00> : vector<32x128xf32>
    %29 = tpu.matmul %26, %28, %cst_21 {dimension_numbers = #tpu.dot_dimension_numbers<[1], [0], [0], [1], [0, 0, 1, 1], [], []>} : vector<32x128xbf16>, vector<128x128xbf16>, vector<32x128xf32> -> vector<32x128xf32>
    %c0_22 = arith.constant 0 : index
    %c0_23 = arith.constant 0 : index
    %c0_24 = arith.constant 0 : index
    %30 = vector.load %arg12[%c0_22, %c0_23, %c0_24] : memref<1x1x128xf32, #tpu.memory_space<vmem>>, vector<1x1x128xf32>
    %31 = vector.shape_cast %30 : vector<1x1x128xf32> to vector<1x128xf32>
    %32 = vector.broadcast %31 : vector<1x128xf32> to vector<32x128xf32>
    %33 = arith.addf %29, %32 : vector<32x128xf32>
    %34 = vector.shape_cast %33 : vector<32x128xf32> to vector<2x16x128xf32>
    %c0_25 = arith.constant 0 : index
    %c0_26 = arith.constant 0 : index
    %c0_27 = arith.constant 0 : index
    %35 = vector.load %arg17[%c0_25, %c0_26, %c0_27] : memref<2x16x128xf32, #tpu.memory_space<vmem>>, vector<2x16x128xf32>
    tpu.vector_store %arg17[%c0_25, %c0_26, %c0_27], %34 {strides = array<i32>} : memref<2x16x128xf32, #tpu.memory_space<vmem>>, vector<2x16x128xf32>,
    %c1_i32 = arith.constant 1 : i32
    %36 = arith.cmpi eq, %arg1, %c1_i32 : i32
    %37 = arith.extui %36 : i1 to i32
    %c0_i32_28 = arith.constant 0 : i32
    %38 = arith.cmpi ne, %37, %c0_i32_28 : i32
    scf.if %38 {
      %c0_29 = arith.constant 0 : index
      %c0_30 = arith.constant 0 : index
      %c0_31 = arith.constant 0 : index
      %39 = vector.load %arg17[%c0_29, %c0_30, %c0_31] : memref<2x16x128xf32, #tpu.memory_space<vmem>>, vector<2x16x128xf32>
      %40 = tpu.iota {dimensions = array<i32: 1>} : vector<1x16x1xi32>
      %c16_i32 = arith.constant 16 : i32
      %41 = vector.broadcast %c16_i32 : i32 to vector<1x16x1xi32>
      %42 = arith.cmpi slt, %40, %41 : vector<1x16x1xi32>
      %43 = arith.extui %42 : vector<1x16x1xi1> to vector<1x16x1xi32>
      %44 = arith.sitofp %43 : vector<1x16x1xi32> to vector<1x16x1xf32>
      %45 = vector.broadcast %44 : vector<1x16x1xf32> to vector<2x16x128xf32>
      %46 = arith.mulf %39, %45 : vector<2x16x128xf32>
      %cst_32 = arith.constant dense<0.000000e+00> : vector<2x128xf32>
      %47 = vector.multi_reduction <add>, %46, %cst_32 [1] : vector<2x16x128xf32> to vector<2x128xf32>
      %cst_33 = arith.constant 6.250000e-02 : f32
      %48 = vector.broadcast %cst_33 : f32 to vector<2x128xf32>
      %49 = arith.mulf %47, %48 : vector<2x128xf32>
      %c0_34 = arith.constant 0 : index
      %c0_35 = arith.constant 0 : index
      %50 = vector.load %arg13[%c0_34, %c0_35] : memref<1x128xf32, #tpu.memory_space<vmem>>, vector<1x128xf32>
      %51 = vector.broadcast %50 : vector<1x128xf32> to vector<2x128xf32>
      %52 = arith.mulf %49, %51 : vector<2x128xf32>
      %cst_36 = arith.constant dense<0.000000e+00> : vector<2xf32>
      %53 = vector.multi_reduction <add>, %52, %cst_36 [1] : vector<2x128xf32> to vector<2xf32>
      %54 = vector.shape_cast %53 : vector<2xf32> to vector<2x1xf32>
      %c0_37 = arith.constant 0 : index
      %55 = memref.load %arg15[%c0_37] : memref<1xf32, #tpu.memory_space<smem>>
      %56 = vector.broadcast %55 : f32 to vector<2x1xf32>
      %57 = arith.addf %54, %56 : vector<2x1xf32>
      %cst_38 = arith.constant 0.000000e+00 : f32
      %58 = vector.broadcast %cst_38 : f32 to vector<2x1xf32>
      %59 = arith.cmpf oge, %57, %58 : vector<2x1xf32>
      %cst_39 = arith.constant 0.00999999977 : f32
      %60 = vector.broadcast %cst_39 : f32 to vector<2x1xf32>
      %61 = arith.mulf %60, %57 : vector<2x1xf32>
      %62 = arith.select %59, %57, %61 : vector<2x1xi1>, vector<2x1xf32>
      %cst_40 = arith.constant 1.000000e+00 : f32
      %63 = vector.broadcast %cst_40 : f32 to vector<2x1xf32>
      %64 = arith.addf %63, %62 : vector<2x1xf32>
      %65 = vector.shape_cast %64 : vector<2x1xf32> to vector<2x1x1xf32>
      %66 = vector.shape_cast %65 : vector<2x1x1xf32> to vector<2x1x1xf32>
      %67 = vector.broadcast %66 : vector<2x1x1xf32> to vector<2x1x128xf32>
      %c0_41 = arith.constant 0 : index
      %c0_42 = arith.constant 0 : index
      %c0_43 = arith.constant 0 : index
      %68 = vector.load %arg16[%c0_41, %c0_42, %c0_43] : memref<2x1x128xf32, #tpu.memory_space<vmem>>, vector<2x1x128xf32>
      tpu.vector_store %arg16[%c0_41, %c0_42, %c0_43], %67 {strides = array<i32>} : memref<2x1x128xf32, #tpu.memory_space<vmem>>, vector<2x1x128xf32>,
    } else {
    }
    return
  }
  func.func @transform_0(%arg0: i32, %arg1: i32) -> (i32, i32, i32) {
    %c0_i32 = arith.constant 0 : i32
    %c0_i32_0 = arith.constant 0 : i32
    %c0_i32_1 = arith.constant 0 : i32
    return %arg0, %c0_i32, %c0_i32_0 : i32, i32, i32
  }
  func.func @transform_1(%arg0: i32, %arg1: i32) -> (i32, i32, i32) {
    %c0_i32 = arith.constant 0 : i32
    %c0_i32_0 = arith.constant 0 : i32
    %c0_i32_1 = arith.constant 0 : i32
    return %arg0, %c0_i32, %c0_i32_0 : i32, i32, i32
  }
  func.func @transform_2(%arg0: i32, %arg1: i32) -> (i32, i32, i32) {
    %c0_i32 = arith.constant 0 : i32
    %c0_i32_0 = arith.constant 0 : i32
    %c0_i32_1 = arith.constant 0 : i32
    return %arg0, %c0_i32, %c0_i32_0 : i32, i32, i32
  }
  func.func @transform_3(%arg0: i32, %arg1: i32) -> (i32, i32) {
    %c0_i32 = arith.constant 0 : i32
    %c0_i32_0 = arith.constant 0 : i32
    %c0_i32_1 = arith.constant 0 : i32
    return %c0_i32, %c0_i32_0 : i32, i32
  }
  func.func @transform_4(%arg0: i32, %arg1: i32) -> (i32, i32) {
    %c0_i32 = arith.constant 0 : i32
    %c0_i32_0 = arith.constant 0 : i32
    %c0_i32_1 = arith.constant 0 : i32
    return %c0_i32, %c0_i32_0 : i32, i32
  }
  func.func @transform_5(%arg0: i32, %arg1: i32) -> (i32, i32) {
    %c0_i32 = arith.constant 0 : i32
    %c0_i32_0 = arith.constant 0 : i32
    %c0_i32_1 = arith.constant 0 : i32
    return %c0_i32, %c0_i32_0 : i32, i32
  }
  func.func @transform_6(%arg0: i32, %arg1: i32) -> (i32, i32) {
    %c0_i32 = arith.constant 0 : i32
    %c0_i32_0 = arith.constant 0 : i32
    %c0_i32_1 = arith.constant 0 : i32
    return %c0_i32, %c0_i32_0 : i32, i32
  }
  func.func @transform_7(%arg0: i32, %arg1: i32) -> (i32, i32, i32) {
    %c0_i32 = arith.constant 0 : i32
    %c0_i32_0 = arith.constant 0 : i32
    %c0_i32_1 = arith.constant 0 : i32
    return %arg1, %c0_i32, %c0_i32_0 : i32, i32, i32
  }
  func.func @transform_8(%arg0: i32, %arg1: i32) -> (i32, i32, i32) {
    %c0_i32 = arith.constant 0 : i32
    %c0_i32_0 = arith.constant 0 : i32
    %c0_i32_1 = arith.constant 0 : i32
    return %arg1, %c0_i32, %c0_i32_0 : i32, i32, i32
  }
  func.func @transform_9(%arg0: i32, %arg1: i32) -> (i32, i32, i32) {
    %c0_i32 = arith.constant 0 : i32
    %c0_i32_0 = arith.constant 0 : i32
    %c0_i32_1 = arith.constant 0 : i32
    return %arg1, %c0_i32, %c0_i32_0 : i32, i32, i32
  }
  func.func @transform_10(%arg0: i32, %arg1: i32) -> (i32, i32, i32) {
    %c0_i32 = arith.constant 0 : i32
    %c0_i32_0 = arith.constant 0 : i32
    %c0_i32_1 = arith.constant 0 : i32
    return %arg1, %c0_i32, %c0_i32_0 : i32, i32, i32
  }
  func.func @transform_11(%arg0: i32, %arg1: i32) -> (i32, i32) {
    %c0_i32 = arith.constant 0 : i32
    %c0_i32_0 = arith.constant 0 : i32
    %c0_i32_1 = arith.constant 0 : i32
    return %c0_i32, %c0_i32_0 : i32, i32
  }
  func.func @transform_12(%arg0: i32, %arg1: i32) -> i32 {
    %c0_i32 = arith.constant 0 : i32
    %c0_i32_0 = arith.constant 0 : i32
    return %c0_i32 : i32
  }
  func.func @transform_13(%arg0: i32, %arg1: i32) -> i32 {
    %c0_i32 = arith.constant 0 : i32
    %c0_i32_0 = arith.constant 0 : i32
    return %c0_i32 : i32
  }
  func.func @transform_14(%arg0: i32, %arg1: i32) -> (i32, i32, i32) {
    %c0_i32 = arith.constant 0 : i32
    %c0_i32_0 = arith.constant 0 : i32
    %c0_i32_1 = arith.constant 0 : i32
    return %arg0, %c0_i32, %c0_i32_0 : i32, i32, i32
  }
}

</mosaic_0001>

<llo_original>
// kernel: tpu_custom_call.1
$region0: #{tpu_custom_call.1}
  #allocation0 [shape = 'u32[]', space=smem, size = 0x4, offset = 0x4, fixed_abs, tag = 'smem constant byte address 0x4 - core index']
  #allocation1 [shape = 'u32[144,128]{1,0:T(1,128)}', space=vmem, size = 0x12000, scoped, tag = 'internal scratch']
  #allocation2 [shape = 'f32[2,16,128]{2,1,0:T(8,128)}', space=vmem, size = 0x4000, scoped, tag = 'scratch operand']
  #allocation3 [shape = 'f32[2,16,128]{2,1,0:T(8,128)}', space=vmem, size = 0x4000, scoped, tag = 'scratch operand']
  #allocation4 [shape = 'f32[1]{0:T(128)S(6)}', space=smem, size = 0x200, scoped, tag = 'scoped memory for tpu_custom_call.1']
  %s0 = inlined_call_operand.vmem [shape: bf16[2,16,16], index: 0, kind: input, shape index: {}]
  %s1 = inlined_call_operand.vmem [shape: bf16[2,16,8], index: 1, kind: input, shape index: {}]
  %s2 = inlined_call_operand.vmem [shape: f32[2,2,16], index: 2, kind: input, shape index: {}]
  %s3 = inlined_call_operand.vmem [shape: bf16[8,128], index: 3, kind: input, shape index: {}]
  %s4 = inlined_call_operand.vmem [shape: f32[1,128], index: 4, kind: input, shape index: {}]
  %s5 = inlined_call_operand.vmem [shape: f32[1,128], index: 5, kind: input, shape index: {}]
  %s6 = inlined_call_operand.vmem [shape: f32[1,128], index: 6, kind: input, shape index: {}]
  %s7 = inlined_call_operand.hbm [shape: bf16[2,128,128], index: 7, kind: input, shape index: {}]
  %s8 = inlined_call_operand.vmem [shape: f32[2,1,128], index: 8, kind: input, shape index: {}]
  %s9 = inlined_call_operand.hbm [shape: bf16[2,128,128], index: 9, kind: input, shape index: {}]
  %s10 = inlined_call_operand.vmem [shape: f32[2,1,128], index: 10, kind: input, shape index: {}]
  %s11 = inlined_call_operand.vmem [shape: f32[1,128], index: 11, kind: input, shape index: {}]
  %s12 = inlined_call_operand.vmem [shape: f32[2], index: 12, kind: input, shape index: {}]
  %s13 = inlined_call_operand.<no memory space> [shape: f32[1], index: 13, kind: input, shape index: {}]
  %s14 = inlined_call_operand.hbm [shape: f32[2,1,128], index: 14, kind: output, shape index: {}]
  %s15 = sld [smem:[#allocation0]]
  $region109: #{tpu_custom_call.1} parent=0
    _
  %s17 = ssub.s32 1, %s15
  %s18 = scalar_select 0, %s17, %s15
  %19 = sst [smem:[#allocation4]] %s13
  $region1: #{tpu_custom_call.1} parent=0
    #allocation5 [shape = 'u8[65536]{0}', space=vmem, size = 0x10000, scoped, tag = 'input window, operand 7']
    #allocation6 [shape = 's32[2]{0}', space=sflag, size = 0x8, scoped, tag = 'scoped memory for tpu_custom_call.1']
    #allocation7 [shape = 's32[2]{0}', space=sflag, size = 0x8, scoped, tag = 'scoped memory for tpu_custom_call.1']
    #allocation8 [shape = 's32[2]{0}', space=sflag, size = 0x8, scoped, tag = 'scoped memory for tpu_custom_call.1']
    #allocation9 [shape = 'u8[65536]{0}', space=vmem, size = 0x10000, scoped, tag = 'input window, operand 9']
    #allocation10 [shape = 's32[2]{0}', space=sflag, size = 0x8, scoped, tag = 'scoped memory for tpu_custom_call.1']
    #allocation11 [shape = 'u8[512]{0}', space=smem, size = 0x200, scoped, tag = 'input window, operand 12, single buffered']
    #allocation12 [shape = 'u8[1024]{0}', space=vmem, size = 0x400, scoped, tag = 'output window, operand 0, single buffered']
    %20 = vsyncpa [#allocation6], 0
    %s21 = scalar_lea.sflag [#allocation6], 1
    %22 = vsyncpa %s21, 0
    %23 = vsyncpa [#allocation10], 0
    %s24 = scalar_lea.sflag [#allocation10], 1
    %25 = vsyncpa %s24, 0
    %26 = vsyncpa [#allocation8], 0
    %27 = vsyncpa [#allocation7], 0
    loop: start=0, step=1, limit=4
    $region2: #{tpu_custom_call.1} parent=1 // loop_pre_header
      _
    $region3: #{tpu_custom_call.1} parent=1 // loop_header
      %s29 = sphi 0, %s33
      %p30 = scmp.ge.s32.totalorder %s29, 4
      %s36 = sphi 0, %s48
      %s37 = sphi 0, %s44
      %s38 = sphi 0, %s36
      %s39 = sphi 0, %s37
      %s40 = sphi 0, %s38
      %s41 = sphi 0, %s39
      %s51 = sphi 0, %s53
      %s54 = sphi 0, %s51
      %s55 = sphi 0, %s54
      %s71 = sphi 0, %s55
      %s77 = sphi 0, %s79
      %s80 = sphi 0, %s77
      %s81 = sphi 0, %s80
      %s97 = sphi 0, %s81
      %s103 = sphi 0, %s105
      %s106 = sphi 0, %s103
      %s107 = sphi 0, %s106
      %s123 = sphi 0, %s107
      %s127 = sphi 0, %s127
      %s129 = sphi 0, %s127
      %s130 = sphi 0, %s129
      %s144 = sphi 0, %s130
      %s148 = sphi 0, %s148
      %s150 = sphi 0, %s148
      %s151 = sphi 0, %s150
      %s165 = sphi 0, %s151
      %s169 = sphi 0, %s169
      %s171 = sphi 0, %s169
      %s172 = sphi 0, %s171
      %s186 = sphi 0, %s172
      %s190 = sphi 0, %s190
      %s192 = sphi 0, %s190
      %s193 = sphi 0, %s192
      %s207 = sphi 0, %s193
      %s213 = sphi 0, %s215
      %s216 = sphi 0, %s213
      %s217 = sphi 0, %s216
      %s233 = sphi 0, %s217
      %s239 = sphi 0, %s241
      %s242 = sphi 0, %s239
      %s243 = sphi 0, %s242
      %s259 = sphi 0, %s243
      %s265 = sphi 0, %s267
      %s268 = sphi 0, %s265
      %s269 = sphi 0, %s268
      %s285 = sphi 0, %s269
      %s291 = sphi 0, %s293
      %s294 = sphi 0, %s291
      %s295 = sphi 0, %s294
      %s311 = sphi 0, %s295
      %s315 = sphi 0, %s315
      %s317 = sphi 0, %s315
      %s318 = sphi 0, %s317
      %s332 = sphi 0, %s318
      %s336 = sphi 0, %s336
      %s338 = sphi 0, %s336
      %s339 = sphi 0, %s338
      %s353 = sphi 0, %s339
      %s357 = sphi 0, %s357
      %s359 = sphi 0, %s357
      %s360 = sphi 0, %s359
      %s374 = sphi 0, %s360
      %s380 = sphi 0, %s382
      %s383 = sphi 0, %s380
      %s384 = sphi 0, %s383
      %s400 = sphi 0, %s384
    $region4: #{tpu_custom_call.1} parent=1 // loop_header_branch
      %32 = sbr.rel (%p30) target = $region8
    $region5: #{tpu_custom_call.1} parent=1 // loop_body
      %s34 = ssub.s32 %s29, 1
      %s35 = ssub.s32 %s29, 2
      %s42 = sadd.s32 1, %s37
      %p43 = scmp.ge.s32.totalorder %s42, 2
      %s44 = scalar_select %p43, 0, %s42
      %s45 = sadd.s32 1, %s36
      %s46 = scalar_select %p43, %s45, %s36
      %p47 = scmp.ge.s32.totalorder %s46, 1
      %s48 = scalar_select %p47, 0, %s46
      %s49 = ssub.s32 %s36, %s48
      %p50 = scmp.eq.s32.totalorder %s49, 0
      %s52 = sadd.s32 %s51, 1
      %s53 = scalar_select %p50, %s51, %s52
      %p56 = pneg %p50
      %p57 = scmp.eq.s32.totalorder %s29, 1
      %p58 = por %p56, %p57
      %p59 = scmp.ne.s32.totalorder %s51, %s54
      %p60 = scmp.eq.s32.totalorder %s29, 0
      %p61 = por %p59, %p60
      %p62 = scmp.ne.s32.totalorder %s51, %s54
      %p63 = scmp.eq.s32.totalorder %s34, 1
      %p64 = por %p62, %p63
      %p65 = scmp.ne.s32.totalorder %s54, %s55
      %p66 = scmp.eq.s32.totalorder %s34, 0
      %p67 = por %p65, %p66
      %p68 = scmp.ne.s32.totalorder %s54, %s55
      %p69 = scmp.eq.s32.totalorder %s35, 1
      %p70 = por %p68, %p69
      %p72 = scmp.ne.s32.totalorder %s55, %s71
      %p73 = scmp.eq.s32.totalorder %s35, 0
      %p74 = por %p72, %p73
      %s75 = ssub.s32 %s36, %s48
      %p76 = scmp.eq.s32.totalorder %s75, 0
      %s78 = sadd.s32 %s77, 1
      %s79 = scalar_select %p76, %s77, %s78
      %p82 = pneg %p76
      %p83 = scmp.eq.s32.totalorder %s29, 1
      %p84 = por %p82, %p83
      %p85 = scmp.ne.s32.totalorder %s77, %s80
      %p86 = scmp.eq.s32.totalorder %s29, 0
      %p87 = por %p85, %p86
      %p88 = scmp.ne.s32.totalorder %s77, %s80
      %p89 = scmp.eq.s32.totalorder %s34, 1
      %p90 = por %p88, %p89
      %p91 = scmp.ne.s32.totalorder %s80, %s81
      %p92 = scmp.eq.s32.totalorder %s34, 0
      %p93 = por %p91, %p92
      %p94 = scmp.ne.s32.totalorder %s80, %s81
      %p95 = scmp.eq.s32.totalorder %s35, 1
      %p96 = por %p94, %p95
      %p98 = scmp.ne.s32.totalorder %s81, %s97
      %p99 = scmp.eq.s32.totalorder %s35, 0
      %p100 = por %p98, %p99
      %s101 = ssub.s32 %s36, %s48
      %p102 = scmp.eq.s32.totalorder %s101, 0
      %s104 = sadd.s32 %s103, 1
      %s105 = scalar_select %p102, %s103, %s104
      %p108 = pneg %p102
      %p109 = scmp.eq.s32.totalorder %s29, 1
      %p110 = por %p108, %p109
      %p111 = scmp.ne.s32.totalorder %s103, %s106
      %p112 = scmp.eq.s32.totalorder %s29, 0
      %p113 = por %p111, %p112
      %p114 = scmp.ne.s32.totalorder %s103, %s106
      %p115 = scmp.eq.s32.totalorder %s34, 1
      %p116 = por %p114, %p115
      %p117 = scmp.ne.s32.totalorder %s106, %s107
      %p118 = scmp.eq.s32.totalorder %s34, 0
      %p119 = por %p117, %p118
      %p120 = scmp.ne.s32.totalorder %s106, %s107
      %p121 = scmp.eq.s32.totalorder %s35, 1
      %p122 = por %p120, %p121
      %p124 = scmp.ne.s32.totalorder %s107, %s123
      %p125 = scmp.eq.s32.totalorder %s35, 0
      %p126 = por %p124, %p125
      %s128 = sadd.s32 %s127, 1
      %p131 = scmp.eq.s32.totalorder %s29, 1
      %p132 = scmp.ne.s32.totalorder %s127, %s129
      %p133 = scmp.eq.s32.totalorder %s29, 0
      %p134 = por %p132, %p133
      %p135 = scmp.ne.s32.totalorder %s127, %s129
      %p136 = scmp.eq.s32.totalorder %s34, 1
      %p137 = por %p135, %p136
      %p138 = scmp.ne.s32.totalorder %s129, %s130
      %p139 = scmp.eq.s32.totalorder %s34, 0
      %p140 = por %p138, %p139
      %p141 = scmp.ne.s32.totalorder %s129, %s130
      %p142 = scmp.eq.s32.totalorder %s35, 1
      %p143 = por %p141, %p142
      %p145 = scmp.ne.s32.totalorder %s130, %s144
      %p146 = scmp.eq.s32.totalorder %s35, 0
      %p147 = por %p145, %p146
      %s149 = sadd.s32 %s148, 1
      %p152 = scmp.eq.s32.totalorder %s29, 1
      %p153 = scmp.ne.s32.totalorder %s148, %s150
      %p154 = scmp.eq.s32.totalorder %s29, 0
      %p155 = por %p153, %p154
      %p156 = scmp.ne.s32.totalorder %s148, %s150
      %p157 = scmp.eq.s32.totalorder %s34, 1
      %p158 = por %p156, %p157
      %p159 = scmp.ne.s32.totalorder %s150, %s151
      %p160 = scmp.eq.s32.totalorder %s34, 0
      %p161 = por %p159, %p160
      %p162 = scmp.ne.s32.totalorder %s150, %s151
      %p163 = scmp.eq.s32.totalorder %s35, 1
      %p164 = por %p162, %p163
      %p166 = scmp.ne.s32.totalorder %s151, %s165
      %p167 = scmp.eq.s32.totalorder %s35, 0
      %p168 = por %p166, %p167
      %s170 = sadd.s32 %s169, 1
      %p173 = scmp.eq.s32.totalorder %s29, 1
      %p174 = scmp.ne.s32.totalorder %s169, %s171
      %p175 = scmp.eq.s32.totalorder %s29, 0
      %p176 = por %p174, %p175
      %p177 = scmp.ne.s32.totalorder %s169, %s171
      %p178 = scmp.eq.s32.totalorder %s34, 1
      %p179 = por %p177, %p178
      %p180 = scmp.ne.s32.totalorder %s171, %s172
      %p181 = scmp.eq.s32.totalorder %s34, 0
      %p182 = por %p180, %p181
      %p183 = scmp.ne.s32.totalorder %s171, %s172
      %p184 = scmp.eq.s32.totalorder %s35, 1
      %p185 = por %p183, %p184
      %p187 = scmp.ne.s32.totalorder %s172, %s186
      %p188 = scmp.eq.s32.totalorder %s35, 0
      %p189 = por %p187, %p188
      %s191 = sadd.s32 %s190, 1
      %p194 = scmp.eq.s32.totalorder %s29, 1
      %p195 = scmp.ne.s32.totalorder %s190, %s192
      %p196 = scmp.eq.s32.totalorder %s29, 0
      %p197 = por %p195, %p196
      %p198 = scmp.ne.s32.totalorder %s190, %s192
      %p199 = scmp.eq.s32.totalorder %s34, 1
      %p200 = por %p198, %p199
      %p201 = scmp.ne.s32.totalorder %s192, %s193
      %p202 = scmp.eq.s32.totalorder %s34, 0
      %p203 = por %p201, %p202
      %p204 = scmp.ne.s32.totalorder %s192, %s193
      %p205 = scmp.eq.s32.totalorder %s35, 1
      %p206 = por %p204, %p205
      %p208 = scmp.ne.s32.totalorder %s193, %s207
      %p209 = scmp.eq.s32.totalorder %s35, 0
      %p210 = por %p208, %p209
      %s211 = ssub.s32 %s37, %s44
      %p212 = scmp.eq.s32.totalorder %s211, 0
      %s214 = sadd.s32 %s213, 1
      %s215 = scalar_select %p212, %s213, %s214
      %p218 = pneg %p212
      %p219 = scmp.eq.s32.totalorder %s29, 1
      %p220 = por %p218, %p219
      %p221 = scmp.ne.s32.totalorder %s213, %s216
      %p222 = scmp.eq.s32.totalorder %s29, 0
      %p223 = por %p221, %p222
      %p224 = scmp.ne.s32.totalorder %s213, %s216
      %p225 = scmp.eq.s32.totalorder %s34, 1
      %p226 = por %p224, %p225
      %p227 = scmp.ne.s32.totalorder %s216, %s217
      %p228 = scmp.eq.s32.totalorder %s34, 0
      %p229 = por %p227, %p228
      %p230 = scmp.ne.s32.totalorder %s216, %s217
      %p231 = scmp.eq.s32.totalorder %s35, 1
      %p232 = por %p230, %p231
      %p234 = scmp.ne.s32.totalorder %s217, %s233
      %p235 = scmp.eq.s32.totalorder %s35, 0
      %p236 = por %p234, %p235
      %s237 = ssub.s32 %s37, %s44
      %p238 = scmp.eq.s32.totalorder %s237, 0
      %s240 = sadd.s32 %s239, 1
      %s241 = scalar_select %p238, %s239, %s240
      %p244 = pneg %p238
      %p245 = scmp.eq.s32.totalorder %s29, 1
      %p246 = por %p244, %p245
      %p247 = scmp.ne.s32.totalorder %s239, %s242
      %p248 = scmp.eq.s32.totalorder %s29, 0
      %p249 = por %p247, %p248
      %p250 = scmp.ne.s32.totalorder %s239, %s242
      %p251 = scmp.eq.s32.totalorder %s34, 1
      %p252 = por %p250, %p251
      %p253 = scmp.ne.s32.totalorder %s242, %s243
      %p254 = scmp.eq.s32.totalorder %s34, 0
      %p255 = por %p253, %p254
      %p256 = scmp.ne.s32.totalorder %s242, %s243
      %p257 = scmp.eq.s32.totalorder %s35, 1
      %p258 = por %p256, %p257
      %p260 = scmp.ne.s32.totalorder %s243, %s259
      %p261 = scmp.eq.s32.totalorder %s35, 0
      %p262 = por %p260, %p261
      %s263 = ssub.s32 %s37, %s44
      %p264 = scmp.eq.s32.totalorder %s263, 0
      %s266 = sadd.s32 %s265, 1
      %s267 = scalar_select %p264, %s265, %s266
      %p270 = pneg %p264
      %p271 = scmp.eq.s32.totalorder %s29, 1
      %p272 = por %p270, %p271
      %p273 = scmp.ne.s32.totalorder %s265, %s268
      %p274 = scmp.eq.s32.totalorder %s29, 0
      %p275 = por %p273, %p274
      %p276 = scmp.ne.s32.totalorder %s265, %s268
      %p277 = scmp.eq.s32.totalorder %s34, 1
      %p278 = por %p276, %p277
      %p279 = scmp.ne.s32.totalorder %s268, %s269
      %p280 = scmp.eq.s32.totalorder %s34, 0
      %p281 = por %p279, %p280
      %p282 = scmp.ne.s32.totalorder %s268, %s269
      %p283 = scmp.eq.s32.totalorder %s35, 1
      %p284 = por %p282, %p283
      %p286 = scmp.ne.s32.totalorder %s269, %s285
      %p287 = scmp.eq.s32.totalorder %s35, 0
      %p288 = por %p286, %p287
      %s289 = ssub.s32 %s37, %s44
      %p290 = scmp.eq.s32.totalorder %s289, 0
      %s292 = sadd.s32 %s291, 1
      %s293 = scalar_select %p290, %s291, %s292
      %p296 = pneg %p290
      %p297 = scmp.eq.s32.totalorder %s29, 1
      %p298 = por %p296, %p297
      %p299 = scmp.ne.s32.totalorder %s291, %s294
      %p300 = scmp.eq.s32.totalorder %s29, 0
      %p301 = por %p299, %p300
      %p302 = scmp.ne.s32.totalorder %s291, %s294
      %p303 = scmp.eq.s32.totalorder %s34, 1
      %p304 = por %p302, %p303
      %p305 = scmp.ne.s32.totalorder %s294, %s295
      %p306 = scmp.eq.s32.totalorder %s34, 0
      %p307 = por %p305, %p306
      %p308 = scmp.ne.s32.totalorder %s294, %s295
      %p309 = scmp.eq.s32.totalorder %s35, 1
      %p310 = por %p308, %p309
      %p312 = scmp.ne.s32.totalorder %s295, %s311
      %p313 = scmp.eq.s32.totalorder %s35, 0
      %p314 = por %p312, %p313
      %s316 = sadd.s32 %s315, 1
      %p319 = scmp.eq.s32.totalorder %s29, 1
      %p320 = scmp.ne.s32.totalorder %s315, %s317
      %p321 = scmp.eq.s32.totalorder %s29, 0
      %p322 = por %p320, %p321
      %p323 = scmp.ne.s32.totalorder %s315, %s317
      %p324 = scmp.eq.s32.totalorder %s34, 1
      %p325 = por %p323, %p324
      %p326 = scmp.ne.s32.totalorder %s317, %s318
      %p327 = scmp.eq.s32.totalorder %s34, 0
      %p328 = por %p326, %p327
      %p329 = scmp.ne.s32.totalorder %s317, %s318
      %p330 = scmp.eq.s32.totalorder %s35, 1
      %p331 = por %p329, %p330
      %p333 = scmp.ne.s32.totalorder %s318, %s332
      %p334 = scmp.eq.s32.totalorder %s35, 0
      %p335 = por %p333, %p334
      %s337 = sadd.s32 %s336, 1
      %p340 = scmp.eq.s32.totalorder %s29, 1
      %p341 = scmp.ne.s32.totalorder %s336, %s338
      %p342 = scmp.eq.s32.totalorder %s29, 0
      %p343 = por %p341, %p342
      %p344 = scmp.ne.s32.totalorder %s336, %s338
      %p345 = scmp.eq.s32.totalorder %s34, 1
      %p346 = por %p344, %p345
      %p347 = scmp.ne.s32.totalorder %s338, %s339
      %p348 = scmp.eq.s32.totalorder %s34, 0
      %p349 = por %p347, %p348
      %p350 = scmp.ne.s32.totalorder %s338, %s339
      %p351 = scmp.eq.s32.totalorder %s35, 1
      %p352 = por %p350, %p351
      %p354 = scmp.ne.s32.totalorder %s339, %s353
      %p355 = scmp.eq.s32.totalorder %s35, 0
      %p356 = por %p354, %p355
      %s358 = sadd.s32 %s357, 1
      %p361 = scmp.eq.s32.totalorder %s29, 1
      %p362 = scmp.ne.s32.totalorder %s357, %s359
      %p363 = scmp.eq.s32.totalorder %s29, 0
      %p364 = por %p362, %p363
      %p365 = scmp.ne.s32.totalorder %s357, %s359
      %p366 = scmp.eq.s32.totalorder %s34, 1
      %p367 = por %p365, %p366
      %p368 = scmp.ne.s32.totalorder %s359, %s360
      %p369 = scmp.eq.s32.totalorder %s34, 0
      %p370 = por %p368, %p369
      %p371 = scmp.ne.s32.totalorder %s359, %s360
      %p372 = scmp.eq.s32.totalorder %s35, 1
      %p373 = por %p371, %p372
      %p375 = scmp.ne.s32.totalorder %s360, %s374
      %p376 = scmp.eq.s32.totalorder %s35, 0
      %p377 = por %p375, %p376
      %s378 = ssub.s32 %s36, %s48
      %p379 = scmp.eq.s32.totalorder %s378, 0
      %s381 = sadd.s32 %s380, 1
      %s382 = scalar_select %p379, %s380, %s381
      %p385 = pneg %p379
      %p386 = scmp.eq.s32.totalorder %s29, 1
      %p387 = por %p385, %p386
      %p388 = scmp.ne.s32.totalorder %s380, %s383
      %p389 = scmp.eq.s32.totalorder %s29, 0
      %p390 = por %p388, %p389
      %p391 = scmp.ne.s32.totalorder %s380, %s383
      %p392 = scmp.eq.s32.totalorder %s34, 1
      %p393 = por %p391, %p392
      %p394 = scmp.ne.s32.totalorder %s383, %s384
      %p395 = scmp.eq.s32.totalorder %s34, 0
      %p396 = por %p394, %p395
      %p397 = scmp.ne.s32.totalorder %s383, %s384
      %p398 = scmp.eq.s32.totalorder %s35, 1
      %p399 = por %p397, %p398
      %p401 = scmp.ne.s32.totalorder %s384, %s400
      %p402 = scmp.eq.s32.totalorder %s35, 0
      %p403 = por %p401, %p402
      %p404 = scmp.le.s32.totalorder 1, %s29
      %p405 = scmp.lt.s32.totalorder %s29, 3
      %p406 = pnand %p404, %p405
      %p407 = pneg %p406
      // Predicated region
      $region9: #{tpu_custom_call.1} parent=5 // pred_check
        _
      $region10: #{tpu_custom_call.1} parent=5 // pred_check_branch
        %409 = sbr.rel (%p406) target = $region12
      $region11: #{tpu_custom_call.1} parent=5 // pred_region
        %s410 = ssub.s32 %s29, 1
        // Predicated region
        $region13: #{tpu_custom_call.1} parent=11 // pred_check
          %p411 = pneg %p67
        $region14: #{tpu_custom_call.1} parent=11 // pred_check_branch
          %413 = sbr.rel (%p411) target = $region16
        $region15: #{tpu_custom_call.1} parent=11 // pred_region
          %s414 = smul.u32 2, %s38
          %p415 = scmp.lt.s32.totalorder %s414, 1
          %s416 = scalar_select %p415, %s414, 1
          %s417 = smul.addr %s416, 2
          %s418 = smul.addr %s417, 4
          %s419 = scalar_lea.vmem %s0, %s418
          %s420 = smul.u32 2, %s38
        $region16: #{tpu_custom_call.1} parent=11 // pred_fallthru
          _
        // Predicated region
        $region17: #{tpu_custom_call.1} parent=11 // pred_check
          %p421 = pneg %p93
        $region18: #{tpu_custom_call.1} parent=11 // pred_check_branch
          %423 = sbr.rel (%p421) target = $region20
        $region19: #{tpu_custom_call.1} parent=11 // pred_region
          %s424 = smul.u32 2, %s38
          %p425 = scmp.lt.s32.totalorder %s424, 1
          %s426 = scalar_select %p425, %s424, 1
          %s427 = smul.addr %s426, 2
          %s428 = smul.addr %s427, 4
          %s429 = scalar_lea.vmem %s1, %s428
          %s430 = smul.u32 2, %s38
        $region20: #{tpu_custom_call.1} parent=11 // pred_fallthru
          _
        // Predicated region
        $region21: #{tpu_custom_call.1} parent=11 // pred_check
          %p431 = pneg %p119
        $region22: #{tpu_custom_call.1} parent=11 // pred_check_branch
          %433 = sbr.rel (%p431) target = $region24
        $region23: #{tpu_custom_call.1} parent=11 // pred_region
          %s434 = smul.u32 2, %s38
          %p435 = scmp.lt.s32.totalorder %s434, 1
          %s436 = scalar_select %p435, %s434, 1
          %s437 = smul.addr %s436, 2
          %s438 = scalar_lea.vmem %s2, %s437
          %s439 = smul.u32 2, %s38
        $region24: #{tpu_custom_call.1} parent=11 // pred_fallthru
          _
        // Predicated region
        $region25: #{tpu_custom_call.1} parent=11 // pred_check
          %p440 = pneg %p140
        $region26: #{tpu_custom_call.1} parent=11 // pred_check_branch
          %442 = sbr.rel (%p440) target = $region28
        $region27: #{tpu_custom_call.1} parent=11 // pred_region
          _
        $region28: #{tpu_custom_call.1} parent=11 // pred_fallthru
          _
        // Predicated region
        $region29: #{tpu_custom_call.1} parent=11 // pred_check
          %p443 = pneg %p161
        $region30: #{tpu_custom_call.1} parent=11 // pred_check_branch
          %445 = sbr.rel (%p443) target = $region32
        $region31: #{tpu_custom_call.1} parent=11 // pred_region
          _
        $region32: #{tpu_custom_call.1} parent=11 // pred_fallthru
          _
        // Predicated region
        $region33: #{tpu_custom_call.1} parent=11 // pred_check
          %p446 = pneg %p182
        $region34: #{tpu_custom_call.1} parent=11 // pred_check_branch
          %448 = sbr.rel (%p446) target = $region36
        $region35: #{tpu_custom_call.1} parent=11 // pred_region
          _
        $region36: #{tpu_custom_call.1} parent=11 // pred_fallthru
          _
        // Predicated region
        $region37: #{tpu_custom_call.1} parent=11 // pred_check
          %p449 = pneg %p203
        $region38: #{tpu_custom_call.1} parent=11 // pred_check_branch
          %451 = sbr.rel (%p449) target = $region40
        $region39: #{tpu_custom_call.1} parent=11 // pred_region
          _
        $region40: #{tpu_custom_call.1} parent=11 // pred_fallthru
          _
        // Predicated region
        $region41: #{tpu_custom_call.1} parent=11 // pred_check
          %p452 = pneg %p328
        $region42: #{tpu_custom_call.1} parent=11 // pred_check_branch
          %454 = sbr.rel (%p452) target = $region44
        $region43: #{tpu_custom_call.1} parent=11 // pred_region
          _
        $region44: #{tpu_custom_call.1} parent=11 // pred_fallthru
          _
        // Predicated region
        $region45: #{tpu_custom_call.1} parent=11 // pred_check
          %p455 = pneg %p349
        $region46: #{tpu_custom_call.1} parent=11 // pred_check_branch
          %457 = sbr.rel (%p455) target = $region48
        $region47: #{tpu_custom_call.1} parent=11 // pred_region
          %s459 = ssub.s32 16, 16
          %460 = vsyncadd [#allocation8], %s459
          %s462 = sshll.u32 %s12, 4
          %s463 = int_to_ptr.vmem [resolvable:$true] %s462
          %465 = dma.vmem_to_smem %s463, 16, [#allocation11], [#allocation8]
        $region48: #{tpu_custom_call.1} parent=11 // pred_fallthru
          _
        // Predicated region
        $region49: #{tpu_custom_call.1} parent=11 // pred_check
          %p466 = pneg %p370
        $region50: #{tpu_custom_call.1} parent=11 // pred_check_branch
          %468 = sbr.rel (%p466) target = $region52
        $region51: #{tpu_custom_call.1} parent=11 // pred_region
          _
        $region52: #{tpu_custom_call.1} parent=11 // pred_fallthru
          _
      $region12: #{tpu_custom_call.1} parent=5 // pred_fallthru
        _
      %p469 = scmp.lt.s32.totalorder %s29, 2
      // Predicated region
      $region53: #{tpu_custom_call.1} parent=5 // pred_check
        %p470 = pneg %p469
      $region54: #{tpu_custom_call.1} parent=5 // pred_check_branch
        %472 = sbr.rel (%p470) target = $region56
      $region55: #{tpu_custom_call.1} parent=5 // pred_region
        // Predicated region
        $region57: #{tpu_custom_call.1} parent=55 // pred_check
          %p473 = pneg %p223
        $region58: #{tpu_custom_call.1} parent=55 // pred_check_branch
          %475 = sbr.rel (%p473) target = $region60
        $region59: #{tpu_custom_call.1} parent=55 // pred_region
          %s476 = sand.u32 %s213, 1
          %s477 = scalar_lea.sflag [#allocation6], %s476
          %s478 = sand.u32 %s213, 1
          %s479 = smul.addr %s478, 64
          %s480 = scalar_lea.vmem [#allocation5], %s479
          %s482 = ssub.s32 1024, 1024
          %483 = vsyncadd %s477, %s482
          %s484 = smul.addr %s37, 16
          %s485 = smul.addr %s484, 64
          %s486 = scalar_lea.hbm %s7, %s485
          %s487 = sshll.u32 %s480, 4
          %s488 = int_to_ptr.vmem [resolvable:$true] %s487
          %493 = dma.hbm_to_vmem [thread:$0]  %s486, 1024, %s488, %s477, 64, 64, 4
        $region60: #{tpu_custom_call.1} parent=55 // pred_fallthru
          _
        // Predicated region
        $region61: #{tpu_custom_call.1} parent=55 // pred_check
          %p494 = pneg %p249
        $region62: #{tpu_custom_call.1} parent=55 // pred_check_branch
          %496 = sbr.rel (%p494) target = $region64
        $region63: #{tpu_custom_call.1} parent=55 // pred_region
          %p497 = scmp.lt.s32.totalorder %s37, 1
          %s498 = scalar_select %p497, %s37, 1
          %s499 = scalar_lea.vmem %s8, %s498
        $region64: #{tpu_custom_call.1} parent=55 // pred_fallthru
          _
        // Predicated region
        $region65: #{tpu_custom_call.1} parent=55 // pred_check
          %p500 = pneg %p275
        $region66: #{tpu_custom_call.1} parent=55 // pred_check_branch
          %502 = sbr.rel (%p500) target = $region68
        $region67: #{tpu_custom_call.1} parent=55 // pred_region
          %s503 = sand.u32 %s265, 1
          %s504 = scalar_lea.sflag [#allocation10], %s503
          %s505 = sand.u32 %s265, 1
          %s506 = smul.addr %s505, 64
          %s507 = scalar_lea.vmem [#allocation9], %s506
          %s509 = ssub.s32 1024, 1024
          %510 = vsyncadd %s504, %s509
          %s511 = smul.addr %s37, 16
          %s512 = smul.addr %s511, 64
          %s513 = scalar_lea.hbm %s9, %s512
          %s514 = sshll.u32 %s507, 4
          %s515 = int_to_ptr.vmem [resolvable:$true] %s514
          %520 = dma.hbm_to_vmem [thread:$0]  %s513, 1024, %s515, %s504, 64, 64, 4
        $region68: #{tpu_custom_call.1} parent=55 // pred_fallthru
          _
        // Predicated region
        $region69: #{tpu_custom_call.1} parent=55 // pred_check
          %p521 = pneg %p301
        $region70: #{tpu_custom_call.1} parent=55 // pred_check_branch
          %523 = sbr.rel (%p521) target = $region72
        $region71: #{tpu_custom_call.1} parent=55 // pred_region
          %p524 = scmp.lt.s32.totalorder %s37, 1
          %s525 = scalar_select %p524, %s37, 1
          %s526 = scalar_lea.vmem %s10, %s525
        $region72: #{tpu_custom_call.1} parent=55 // pred_fallthru
          _
      $region56: #{tpu_custom_call.1} parent=5 // pred_fallthru
        _
      %p527 = scmp.le.s32.totalorder 1, %s29
      %p528 = scmp.lt.s32.totalorder %s29, 3
      %p529 = pnand %p527, %p528
      %p530 = pneg %p529
      // Predicated region
      $region73: #{tpu_custom_call.1} parent=5 // pred_check
        _
      $region74: #{tpu_custom_call.1} parent=5 // pred_check_branch
        %532 = sbr.rel (%p529) target = $region76
      $region75: #{tpu_custom_call.1} parent=5 // pred_region
        %s533 = ssub.s32 %s29, 1
        %s534 = sand.u32 %s216, 1
        %s535 = scalar_lea.sflag [#allocation6], %s534
        %s536 = sand.u32 %s216, 1
        %s537 = smul.addr %s536, 64
        %s538 = scalar_lea.vmem [#allocation5], %s537
        // Predicated region
        $region77: #{tpu_custom_call.1} parent=75 // pred_check
          %p539 = pneg %p229
        $region78: #{tpu_custom_call.1} parent=75 // pred_check_branch
          %541 = sbr.rel (%p539) target = $region80
        $region79: #{tpu_custom_call.1} parent=75 // pred_region
          %542 = dma.done %s535, 1024
        $region80: #{tpu_custom_call.1} parent=75 // pred_fallthru
          _
        %s543 = sand.u32 %s268, 1
        %s544 = scalar_lea.sflag [#allocation10], %s543
        %s545 = sand.u32 %s268, 1
        %s546 = smul.addr %s545, 64
        %s547 = scalar_lea.vmem [#allocation9], %s546
        // Predicated region
        $region81: #{tpu_custom_call.1} parent=75 // pred_check
          %p548 = pneg %p281
        $region82: #{tpu_custom_call.1} parent=75 // pred_check_branch
          %550 = sbr.rel (%p548) target = $region84
        $region83: #{tpu_custom_call.1} parent=75 // pred_region
          %551 = dma.done %s544, 1024
        $region84: #{tpu_custom_call.1} parent=75 // pred_fallthru
          _
        // Predicated region
        $region85: #{tpu_custom_call.1} parent=75 // pred_check
          %p552 = pneg %p349
        $region86: #{tpu_custom_call.1} parent=75 // pred_check_branch
          %554 = sbr.rel (%p552) target = $region88
        $region87: #{tpu_custom_call.1} parent=75 // pred_region
          %555 = dma.done [#allocation8], 16
        $region88: #{tpu_custom_call.1} parent=75 // pred_fallthru
          _
        %556 = sfence
        %s557 = smul.u32 2, %s38
        %p558 = scmp.lt.s32.totalorder %s557, 1
        %s559 = scalar_select %p558, %s557, 1
        %s560 = smul.addr %s559, 2
        %s561 = smul.addr %s560, 4
        %s562 = scalar_lea.vmem %s0, %s561
        %p563 = pneg %p67
        %p564 = pneg %p64
        %s565 = smul.u32 2, %s38
        %p566 = scmp.lt.s32.totalorder %s565, 1
        %s567 = scalar_select %p566, %s565, 1
        %s568 = smul.addr %s567, 2
        %s569 = smul.addr %s568, 4
        %s570 = scalar_lea.vmem %s1, %s569
        %p571 = pneg %p93
        %p572 = pneg %p90
        %s573 = smul.u32 2, %s38
        %p574 = scmp.lt.s32.totalorder %s573, 1
        %s575 = scalar_select %p574, %s573, 1
        %s576 = smul.addr %s575, 2
        %s577 = scalar_lea.vmem %s2, %s576
        %p578 = pneg %p119
        %p579 = pneg %p116
        %p580 = pneg %p140
        %p581 = pneg %p137
        %p582 = pneg %p161
        %p583 = pneg %p158
        %p584 = pneg %p182
        %p585 = pneg %p179
        %p586 = pneg %p203
        %p587 = pneg %p200
        %s588 = sand.u32 %s216, 1
        %s589 = scalar_lea.sflag [#allocation6], %s588
        %s590 = sand.u32 %s216, 1
        %s591 = smul.addr %s590, 64
        %s592 = scalar_lea.vmem [#allocation5], %s591
        %p593 = pneg %p229
        %p594 = pneg %p226
        %p595 = scmp.lt.s32.totalorder %s39, 1
        %s596 = scalar_select %p595, %s39, 1
        %s597 = scalar_lea.vmem %s8, %s596
        %p598 = pneg %p255
        %p599 = pneg %p252
        %s600 = sand.u32 %s268, 1
        %s601 = scalar_lea.sflag [#allocation10], %s600
        %s602 = sand.u32 %s268, 1
        %s603 = smul.addr %s602, 64
        %s604 = scalar_lea.vmem [#allocation9], %s603
        %p605 = pneg %p281
        %p606 = pneg %p278
        %p607 = scmp.lt.s32.totalorder %s39, 1
        %s608 = scalar_select %p607, %s39, 1
        %s609 = scalar_lea.vmem %s10, %s608
        %p610 = pneg %p307
        %p611 = pneg %p304
        %p612 = pneg %p328
        %p613 = pneg %p325
        %p614 = pneg %p349
        %p615 = pneg %p346
        %p616 = pneg %p370
        %p617 = pneg %p367
        %p618 = pneg %p396
        %p619 = pneg %p393
        %s620 = smul.u32 2, %s38
        %p621 = scmp.lt.s32.totalorder %s620, 1
        %s622 = scalar_select %p621, %s620, 1
        %s623 = smul.addr %s622, 2
        %s624 = smul.addr %s623, 4
        %s625 = scalar_lea.vmem %s0, %s624
        %s626 = smul.u32 2, %s38
        %s627 = smul.u32 2, %s38
        %p628 = scmp.lt.s32.totalorder %s627, 1
        %s629 = scalar_select %p628, %s627, 1
        %s630 = smul.addr %s629, 2
        %s631 = smul.addr %s630, 4
        %s632 = scalar_lea.vmem %s1, %s631
        %s633 = smul.u32 2, %s38
        %s634 = smul.u32 2, %s38
        %p635 = scmp.lt.s32.totalorder %s634, 1
        %s636 = scalar_select %p635, %s634, 1
        %s637 = smul.addr %s636, 2
        %s638 = scalar_lea.vmem %s2, %s637
        %s639 = smul.u32 2, %s38
        %p640 = scmp.lt.s32.totalorder %s39, 1
        %s641 = scalar_select %p640, %s39, 1
        %s642 = scalar_lea.vmem %s8, %s641
        %p643 = scmp.lt.s32.totalorder %s39, 1
        %s644 = scalar_select %p643, %s39, 1
        %s645 = scalar_lea.vmem %s10, %s644
        %s646 = smul.u32 2, %s38
        %p648 = scmp.eq.s32.totalorder %s39, 0
        // Predicated region
        $region89: #{tpu_custom_call.1} parent=75 // pred_check
          %p649 = pneg %p648
        $region90: #{tpu_custom_call.1} parent=75 // pred_check_branch
          %651 = sbr.rel (%p649) target = $region92
        $region91: #{tpu_custom_call.1} parent=75 // pred_region
          %v652 = vld [vmem:[%s632] sm:$0xf]
          %v653 = vld [vmem:[%s632 + $0x4] sm:$0xf]
          %v654 = vld [vmem:[%s632 + $0x8] sm:$0xf]
          %v655 = vld [vmem:[%s632 + $0xc] sm:$0xf]
          %v656 = vld [vmem:[%s3] sm:$0xf]
          %v657 = vld [vmem:[%s4] sm:$0x1]
          %v659 = vlaneseq
          %v660 = vshrl.u32 %v659, 7
          %v661 = vsub.s32 0, %v660
          %v662 = vrot.slane %v657, %v661
          %v668 = vunpack.c.l.b16 %v652
          %v669 = vunpack.c.l.b16 %v653
          %v670 = vunpack.c.l.b16 %v654
          %v671 = vunpack.c.l.b16 %v655
          %v672 = vpack.c.b16 %v669, %v668
          %v673 = vpack.c.b16 %v671, %v670
          %vm674 = vcmask 64512
          %v676 = vsel %vm674, %v672, 0
          %v679 = vsel %vm674, %v673, 0
          %vm681 = vcmask 1043456
          %v683 = vsel %vm681, %v656, 0
          %685 = vmatprep.subr.bf16.mxu0 0
          %686 = vmatpush1.bf16.msra.mxu0 %v683
          %687 = vmatprep.subr.bf16.mxu0 0
          %688 = vmatpush1.bf16.msra.mxu0 0
          %689 = vmatprep.subr.bf16.mxu0 0
          %690 = vmatpush1.bf16.msra.mxu0 0
          %691 = vmatprep.subr.bf16.mxu0 0
          %692 = vmatpush1.bf16.msra.mxu0 0
          %693 = vmatprep.subr.bf16.mxu0 0
          %694 = vmatpush1.bf16.msra.mxu0 0
          %695 = vmatprep.subr.bf16.mxu0 0
          %696 = vmatpush1.bf16.msra.mxu0 0
          %697 = vmatprep.subr.bf16.mxu0 0
          %698 = vmatpush1.bf16.msra.mxu0 0
          %699 = vmatprep.subr.bf16.mxu0 0
          %700 = vmatpush1.bf16.msra.mxu0 0
          %701 = vmatprep.subr.bf16.mxu0 0
          %702 = vmatpush1.bf16.msra.mxu0 0
          %703 = vmatprep.subr.bf16.mxu0 0
          %704 = vmatpush1.bf16.msra.mxu0 0
          %705 = vmatprep.subr.bf16.mxu0 0
          %706 = vmatpush1.bf16.msra.mxu0 0
          %707 = vmatprep.subr.bf16.mxu0 0
          %708 = vmatpush1.bf16.msra.mxu0 0
          %709 = vmatprep.subr.bf16.mxu0 0
          %710 = vmatpush1.bf16.msra.mxu0 0
          %711 = vmatprep.subr.bf16.mxu0 0
          %712 = vmatpush1.bf16.msra.mxu0 0
          %713 = vmatprep.subr.bf16.mxu0 0
          %714 = vmatpush1.bf16.msra.mxu0 0
          %715 = vmatprep.subr.bf16.mxu0 0
          %716 = vmatpush1.bf16.msra.mxu0 0
          %717 = vmatprep.mubr.bf16.mxu0 0
          %718 = vmatmul.mubr.bf16.gmra.mrb[0].mxu0 %v676
          %v719 = vpop.f32.mrb[0].mxu0
          %v720 = vadd.f32 %v662, %v719
          %v721 = vpop.f32.mrb[0].mxu0
          %v722 = vpop.f32.mrb[0].mxu0
          %v723 = vadd.f32 %v662, %v722
          %v724 = vpop.f32.mrb[0].mxu0
          %725 = vmatprep.mubr.bf16.mxu0 0
          %726 = vmatmul.mubr.bf16.gmra.mrb[0].mxu0 %v679
          %v727 = vpop.f32.mrb[0].mxu0
          %v728 = vadd.f32 %v662, %v727
          %v729 = vpop.f32.mrb[0].mxu0
          %v730 = vpop.f32.mrb[0].mxu0
          %v731 = vadd.f32 %v662, %v730
          %v732 = vpop.f32.mrb[0].mxu0
          %733 = vdwg.mxu0
          %734 = vst [vmem:[#allocation2] sm:$0xff] %v720
          %735 = vst [vmem:[#allocation2 + $0x8] sm:$0xff] %v723
          %736 = vst [vmem:[#allocation2 + $0x10] sm:$0xff] %v728
          %737 = vst [vmem:[#allocation2 + $0x18] sm:$0xff] %v731
          %v738 = vld [vmem:[%s638] sm:$0x3]
          %v739 = vld [vmem:[%s638 + $0x2] sm:$0x3]
          %v740 = vlaneseq
          %v741 = vshrl.u32 %v740, 7
          %v742 = vsub.s32 0, %v741
          %v743 = vrot.slane %v738, %v742
          %745 = vbcast.lane.b32.xlu0 %v743, 256
          %v746 = vpop.permute.xlu0 %745
          %s748 = sor.u32 256, 8
          %749 = vbcast.lane.b32.xlu0 %v743, %s748
          %v750 = vpop.permute.xlu0 %749
          %v751 = vlaneseq
          %v752 = vshrl.u32 %v751, 7
          %v753 = vsub.s32 0, %v752
          %v754 = vrot.slane %v739, %v753
          %756 = vbcast.lane.b32.xlu0 %v754, 256
          %v757 = vpop.permute.xlu0 %756
          %s759 = sor.u32 256, 8
          %760 = vbcast.lane.b32.xlu0 %v754, %s759
          %v761 = vpop.permute.xlu0 %760
          %v762 = vld [vmem:[%s5] sm:$0x1]
          %v764 = vlaneseq
          %v765 = vshrl.u32 %v764, 7
          %v766 = vsub.s32 0, %v765
          %v767 = vrot.slane %v762, %v766
          %v769 = vmul.f32 %v746, %v767
          %v770 = vmul.f32 %v750, %v767
          %v771 = vmul.f32 %v757, %v767
          %v772 = vmul.f32 %v761, %v767
          %v773 = vlaneseq
          %v774 = vshrl.u32 %v773, 7
          %v775 = vsub.s32 1, %v774
          %v776 = vrot.slane %v738, %v775
          %778 = vbcast.lane.b32.xlu0 %v776, 256
          %v779 = vpop.permute.xlu0 %778
          %s781 = sor.u32 256, 8
          %782 = vbcast.lane.b32.xlu0 %v776, %s781
          %v783 = vpop.permute.xlu0 %782
          %v784 = vlaneseq
          %v785 = vshrl.u32 %v784, 7
          %v786 = vsub.s32 1, %v785
          %v787 = vrot.slane %v739, %v786
          %789 = vbcast.lane.b32.xlu0 %v787, 256
          %v790 = vpop.permute.xlu0 %789
          %s792 = sor.u32 256, 8
          %793 = vbcast.lane.b32.xlu0 %v787, %s792
          %v794 = vpop.permute.xlu0 %793
          %v795 = vld [vmem:[%s6] sm:$0x1]
          %v797 = vlaneseq
          %v798 = vshrl.u32 %v797, 7
          %v799 = vsub.s32 0, %v798
          %v800 = vrot.slane %v795, %v799
          %v802 = vmul.f32 %v779, %v800
          %v803 = vmul.f32 %v783, %v800
          %v804 = vmul.f32 %v790, %v800
          %v805 = vmul.f32 %v794, %v800
          %v806 = vadd.f32 %v769, %v802
          %v807 = vadd.f32 %v770, %v803
          %v808 = vadd.f32 %v771, %v804
          %v809 = vadd.f32 %v772, %v805
          %810 = vst [vmem:[#allocation3] sm:$0xff] %v806
          %811 = vst [vmem:[#allocation3 + $0x8] sm:$0xff] %v807
          %812 = vst [vmem:[#allocation3 + $0x10] sm:$0xff] %v808
          %813 = vst [vmem:[#allocation3 + $0x18] sm:$0xff] %v809
        $region92: #{tpu_custom_call.1} parent=75 // pred_fallthru
          _
        %s814 = sld [smem:[#allocation11 + %s39]]
        %s815 = sadd.f32 %s814, 1.0
        %v816 = vld [vmem:[#allocation2] sm:$0xff]
        %v817 = vld [vmem:[#allocation2 + $0x8] sm:$0xff]
        %v818 = vld [vmem:[#allocation2 + $0x10] sm:$0xff]
        %v819 = vld [vmem:[#allocation2 + $0x18] sm:$0xff]
        %v820 = vld [vmem:[%s625] sm:$0xf]
        %v821 = vld [vmem:[%s625 + $0x4] sm:$0xf]
        %v822 = vld [vmem:[%s625 + $0x8] sm:$0xf]
        %v823 = vld [vmem:[%s625 + $0xc] sm:$0xf]
        %v824 = vpack.c.bf16 %v817, %v816
        %v825 = vpack.c.bf16 %v819, %v818
        %v828 = vunpack.c.l.b16 %v820
        %v829 = vunpack.c.l.b16 %v821
        %v830 = vpack.c.b16 %v829, %v828
        %vm831 = vcmask 130048
        %v833 = vsel %vm831, %v830, 0
        %835 = vmatprep.subr.bf16.mxu0 0
        %836 = vmatpush1.bf16.msra.mxu0 %v824
        %837 = vmatprep.subr.bf16.mxu0 0
        %838 = vmatpush1.bf16.msra.mxu0 0
        %839 = vmatprep.subr.bf16.mxu0 0
        %840 = vmatpush1.bf16.msra.mxu0 0
        %841 = vmatprep.subr.bf16.mxu0 0
        %842 = vmatpush1.bf16.msra.mxu0 0
        %843 = vmatprep.subr.bf16.mxu0 0
        %844 = vmatpush1.bf16.msra.mxu0 0
        %845 = vmatprep.subr.bf16.mxu0 0
        %846 = vmatpush1.bf16.msra.mxu0 0
        %847 = vmatprep.subr.bf16.mxu0 0
        %848 = vmatpush1.bf16.msra.mxu0 0
        %849 = vmatprep.subr.bf16.mxu0 0
        %850 = vmatpush1.bf16.msra.mxu0 0
        %851 = vmatprep.subr.bf16.mxu0 0
        %852 = vmatpush1.bf16.msra.mxu0 0
        %853 = vmatprep.subr.bf16.mxu0 0
        %854 = vmatpush1.bf16.msra.mxu0 0
        %855 = vmatprep.subr.bf16.mxu0 0
        %856 = vmatpush1.bf16.msra.mxu0 0
        %857 = vmatprep.subr.bf16.mxu0 0
        %858 = vmatpush1.bf16.msra.mxu0 0
        %859 = vmatprep.subr.bf16.mxu0 0
        %860 = vmatpush1.bf16.msra.mxu0 0
        %861 = vmatprep.subr.bf16.mxu0 0
        %862 = vmatpush1.bf16.msra.mxu0 0
        %863 = vmatprep.subr.bf16.mxu0 0
        %864 = vmatpush1.bf16.msra.mxu0 0
        %865 = vmatprep.subr.bf16.mxu0 0
        %866 = vmatpush1.bf16.msra.mxu0 0
        %867 = vmatprep.mubr.bf16.mxu0 0
        %868 = vmatmul.mubr.bf16.gmra.mrb[0].mxu0 %v833
        %v869 = vpop.f32.mrb[0].mxu0
        %v870 = vadd.f32 0.0, %v869
        %v871 = vpop.f32.mrb[0].mxu0
        %v872 = vpop.f32.mrb[0].mxu0
        %v873 = vadd.f32 0.0, %v872
        %v874 = vpop.f32.mrb[0].mxu0
        %875 = vdwg.mxu0
        %v878 = vunpack.c.l.b16 %v822
        %v879 = vunpack.c.l.b16 %v823
        %v880 = vpack.c.b16 %v879, %v878
        %v882 = vsel %vm831, %v880, 0
        %884 = vmatprep.subr.bf16.mxu0 0
        %885 = vmatpush1.bf16.msra.mxu0 %v825
        %886 = vmatprep.subr.bf16.mxu0 0
        %887 = vmatpush1.bf16.msra.mxu0 0
        %888 = vmatprep.subr.bf16.mxu0 0
        %889 = vmatpush1.bf16.msra.mxu0 0
        %890 = vmatprep.subr.bf16.mxu0 0
        %891 = vmatpush1.bf16.msra.mxu0 0
        %892 = vmatprep.subr.bf16.mxu0 0
        %893 = vmatpush1.bf16.msra.mxu0 0
        %894 = vmatprep.subr.bf16.mxu0 0
        %895 = vmatpush1.bf16.msra.mxu0 0
        %896 = vmatprep.subr.bf16.mxu0 0
        %897 = vmatpush1.bf16.msra.mxu0 0
        %898 = vmatprep.subr.bf16.mxu0 0
        %899 = vmatpush1.bf16.msra.mxu0 0
        %900 = vmatprep.subr.bf16.mxu0 0
        %901 = vmatpush1.bf16.msra.mxu0 0
        %902 = vmatprep.subr.bf16.mxu0 0
        %903 = vmatpush1.bf16.msra.mxu0 0
        %904 = vmatprep.subr.bf16.mxu0 0
        %905 = vmatpush1.bf16.msra.mxu0 0
        %906 = vmatprep.subr.bf16.mxu0 0
        %907 = vmatpush1.bf16.msra.mxu0 0
        %908 = vmatprep.subr.bf16.mxu0 0
        %909 = vmatpush1.bf16.msra.mxu0 0
        %910 = vmatprep.subr.bf16.mxu0 0
        %911 = vmatpush1.bf16.msra.mxu0 0
        %912 = vmatprep.subr.bf16.mxu0 0
        %913 = vmatpush1.bf16.msra.mxu0 0
        %914 = vmatprep.subr.bf16.mxu0 0
        %915 = vmatpush1.bf16.msra.mxu0 0
        %916 = vmatprep.mubr.bf16.mxu0 0
        %917 = vmatmul.mubr.bf16.gmra.mrb[0].mxu0 %v882
        %v918 = vpop.f32.mrb[0].mxu0
        %v919 = vadd.f32 0.0, %v918
        %v920 = vpop.f32.mrb[0].mxu0
        %v921 = vpop.f32.mrb[0].mxu0
        %v922 = vadd.f32 0.0, %v921
        %v923 = vpop.f32.mrb[0].mxu0
        %924 = vdwg.mxu0
        %v925 = vstv %s815
        %v926 = vmul.f32 %v816, %v925
        %v927 = vmul.f32 %v817, %v925
        %v928 = vmul.f32 %v818, %v925
        %v929 = vmul.f32 %v819, %v925
        %v930 = vadd.f32 %v926, %v870
        %v931 = vadd.f32 %v927, %v873
        %v932 = vadd.f32 %v928, %v919
        %v933 = vadd.f32 %v929, %v922
        %v934 = vld [vmem:[#allocation3] sm:$0xff]
        %v935 = vld [vmem:[#allocation3 + $0x8] sm:$0xff]
        %v936 = vld [vmem:[#allocation3 + $0x10] sm:$0xff]
        %v937 = vld [vmem:[#allocation3 + $0x18] sm:$0xff]
        %v938 = vadd.f32 %v930, %v934
        %v939 = vadd.f32 %v931, %v935
        %v940 = vadd.f32 %v932, %v936
        %v941 = vadd.f32 %v933, %v937
        %v942 = vpack.c.bf16 %v939, %v938
        %v943 = vpack.c.bf16 %v941, %v940
        %v944 = vld [vmem:[%s538] sm:$0xf]
        %v945 = vld [vmem:[%s538 + $0x4] sm:$0xf]
        %v946 = vld [vmem:[%s538 + $0x8] sm:$0xf]
        %v947 = vld [vmem:[%s538 + $0xc] sm:$0xf]
        %v948 = vld [vmem:[%s538 + $0x10] sm:$0xf]
        %v949 = vld [vmem:[%s538 + $0x14] sm:$0xf]
        %v950 = vld [vmem:[%s538 + $0x18] sm:$0xf]
        %v951 = vld [vmem:[%s538 + $0x1c] sm:$0xf]
        %v952 = vld [vmem:[%s538 + $0x20] sm:$0xf]
        %v953 = vld [vmem:[%s538 + $0x24] sm:$0xf]
        %v954 = vld [vmem:[%s538 + $0x28] sm:$0xf]
        %v955 = vld [vmem:[%s538 + $0x2c] sm:$0xf]
        %v956 = vld [vmem:[%s538 + $0x30] sm:$0xf]
        %v957 = vld [vmem:[%s538 + $0x34] sm:$0xf]
        %v958 = vld [vmem:[%s538 + $0x38] sm:$0xf]
        %v959 = vld [vmem:[%s538 + $0x3c] sm:$0xf]
        %v960 = vld [vmem:[%s642] sm:$0x1]
        %v962 = vlaneseq
        %v963 = vshrl.u32 %v962, 7
        %v964 = vsub.s32 0, %v963
        %v965 = vrot.slane %v960, %v964
        %v983 = vunpack.c.l.b16 %v944
        %v984 = vunpack.c.l.b16 %v945
        %v985 = vunpack.c.l.b16 %v946
        %v986 = vunpack.c.l.b16 %v947
        %v987 = vunpack.c.l.b16 %v948
        %v988 = vunpack.c.l.b16 %v949
        %v989 = vunpack.c.l.b16 %v950
        %v990 = vunpack.c.l.b16 %v951
        %v991 = vunpack.c.l.b16 %v952
        %v992 = vunpack.c.l.b16 %v953
        %v993 = vunpack.c.l.b16 %v954
        %v994 = vunpack.c.l.b16 %v955
        %v995 = vunpack.c.l.b16 %v956
        %v996 = vunpack.c.l.b16 %v957
        %v997 = vunpack.c.l.b16 %v958
        %v998 = vunpack.c.l.b16 %v959
        %v999 = vpack.c.b16 %v984, %v983
        %v1000 = vpack.c.b16 %v986, %v985
        %v1001 = vpack.c.b16 %v988, %v987
        %v1002 = vpack.c.b16 %v990, %v989
        %v1003 = vpack.c.b16 %v992, %v991
        %v1004 = vpack.c.b16 %v994, %v993
        %v1005 = vpack.c.b16 %v996, %v995
        %v1006 = vpack.c.b16 %v998, %v997
        %1015 = vmatprep.subr.bf16.mxu0 0
        %1016 = vmatpush1.bf16.msra.mxu0 %v999
        %1017 = vmatprep.subr.bf16.mxu0 0
        %1018 = vmatpush1.bf16.msra.mxu0 %v1000
        %1019 = vmatprep.subr.bf16.mxu0 0
        %1020 = vmatpush1.bf16.msra.mxu0 %v1001
        %1021 = vmatprep.subr.bf16.mxu0 0
        %1022 = vmatpush1.bf16.msra.mxu0 %v1002
        %1023 = vmatprep.subr.bf16.mxu0 0
        %1024 = vmatpush1.bf16.msra.mxu0 %v1003
        %1025 = vmatprep.subr.bf16.mxu0 0
        %1026 = vmatpush1.bf16.msra.mxu0 %v1004
        %1027 = vmatprep.subr.bf16.mxu0 0
        %1028 = vmatpush1.bf16.msra.mxu0 %v1005
        %1029 = vmatprep.subr.bf16.mxu0 0
        %1030 = vmatpush1.bf16.msra.mxu0 %v1006
        %1031 = vmatprep.subr.bf16.mxu0 0
        %1032 = vmatpush1.bf16.msra.mxu0 0
        %1033 = vmatprep.subr.bf16.mxu0 0
        %1034 = vmatpush1.bf16.msra.mxu0 0
        %1035 = vmatprep.subr.bf16.mxu0 0
        %1036 = vmatpush1.bf16.msra.mxu0 0
        %1037 = vmatprep.subr.bf16.mxu0 0
        %1038 = vmatpush1.bf16.msra.mxu0 0
        %1039 = vmatprep.subr.bf16.mxu0 0
        %1040 = vmatpush1.bf16.msra.mxu0 0
        %1041 = vmatprep.subr.bf16.mxu0 0
        %1042 = vmatpush1.bf16.msra.mxu0 0
        %1043 = vmatprep.subr.bf16.mxu0 0
        %1044 = vmatpush1.bf16.msra.mxu0 0
        %1045 = vmatprep.subr.bf16.mxu0 0
        %1046 = vmatpush1.bf16.msra.mxu0 0
        %1047 = vmatprep.mubr.bf16.mxu0 0
        %1048 = vmatmul.mubr.bf16.gmra.mrb[0].mxu0 %v942
        %v1049 = vpop.f32.mrb[0].mxu0
        %v1050 = vadd.f32 %v965, %v1049
        %v1051 = vpop.f32.mrb[0].mxu0
        %v1052 = vpop.f32.mrb[0].mxu0
        %v1053 = vadd.f32 %v965, %v1052
        %v1054 = vpop.f32.mrb[0].mxu0
        %1055 = vmatprep.mubr.bf16.mxu0 0
        %1056 = vmatmul.mubr.bf16.gmra.mrb[0].mxu0 %v943
        %v1057 = vpop.f32.mrb[0].mxu0
        %v1058 = vadd.f32 %v965, %v1057
        %v1059 = vpop.f32.mrb[0].mxu0
        %v1060 = vpop.f32.mrb[0].mxu0
        %v1061 = vadd.f32 %v965, %v1060
        %v1062 = vpop.f32.mrb[0].mxu0
        %1063 = vdwg.mxu0
        %v1064 = vmax.f32 %v1050, 0.0
        %v1065 = vmax.f32 %v1053, 0.0
        %v1066 = vmax.f32 %v1058, 0.0
        %v1067 = vmax.f32 %v1061, 0.0
        %v1068 = vpack.c.bf16 %v1065, %v1064
        %v1069 = vpack.c.bf16 %v1067, %v1066
        %v1070 = vld [vmem:[%s547] sm:$0xf]
        %v1071 = vld [vmem:[%s547 + $0x4] sm:$0xf]
        %v1072 = vld [vmem:[%s547 + $0x8] sm:$0xf]
        %v1073 = vld [vmem:[%s547 + $0xc] sm:$0xf]
        %v1074 = vld [vmem:[%s547 + $0x10] sm:$0xf]
        %v1075 = vld [vmem:[%s547 + $0x14] sm:$0xf]
        %v1076 = vld [vmem:[%s547 + $0x18] sm:$0xf]
        %v1077 = vld [vmem:[%s547 + $0x1c] sm:$0xf]
        %v1078 = vld [vmem:[%s547 + $0x20] sm:$0xf]
        %v1079 = vld [vmem:[%s547 + $0x24] sm:$0xf]
        %v1080 = vld [vmem:[%s547 + $0x28] sm:$0xf]
        %v1081 = vld [vmem:[%s547 + $0x2c] sm:$0xf]
        %v1082 = vld [vmem:[%s547 + $0x30] sm:$0xf]
        %v1083 = vld [vmem:[%s547 + $0x34] sm:$0xf]
        %v1084 = vld [vmem:[%s547 + $0x38] sm:$0xf]
        %v1085 = vld [vmem:[%s547 + $0x3c] sm:$0xf]
        %v1086 = vld [vmem:[%s645] sm:$0x1]
        %v1088 = vlaneseq
        %v1089 = vshrl.u32 %v1088, 7
        %v1090 = vsub.s32 0, %v1089
        %v1091 = vrot.slane %v1086, %v1090
        %v1109 = vunpack.c.l.b16 %v1070
        %v1110 = vunpack.c.l.b16 %v1071
        %v1111 = vunpack.c.l.b16 %v1072
        %v1112 = vunpack.c.l.b16 %v1073
        %v1113 = vunpack.c.l.b16 %v1074
        %v1114 = vunpack.c.l.b16 %v1075
        %v1115 = vunpack.c.l.b16 %v1076
        %v1116 = vunpack.c.l.b16 %v1077
        %v1117 = vunpack.c.l.b16 %v1078
        %v1118 = vunpack.c.l.b16 %v1079
        %v1119 = vunpack.c.l.b16 %v1080
        %v1120 = vunpack.c.l.b16 %v1081
        %v1121 = vunpack.c.l.b16 %v1082
        %v1122 = vunpack.c.l.b16 %v1083
        %v1123 = vunpack.c.l.b16 %v1084
        %v1124 = vunpack.c.l.b16 %v1085
        %v1125 = vpack.c.b16 %v1110, %v1109
        %v1126 = vpack.c.b16 %v1112, %v1111
        %v1127 = vpack.c.b16 %v1114, %v1113
        %v1128 = vpack.c.b16 %v1116, %v1115
        %v1129 = vpack.c.b16 %v1118, %v1117
        %v1130 = vpack.c.b16 %v1120, %v1119
        %v1131 = vpack.c.b16 %v1122, %v1121
        %v1132 = vpack.c.b16 %v1124, %v1123
        %1141 = vmatprep.subr.bf16.mxu0 0
        %1142 = vmatpush1.bf16.msra.mxu0 %v1125
        %1143 = vmatprep.subr.bf16.mxu0 0
        %1144 = vmatpush1.bf16.msra.mxu0 %v1126
        %1145 = vmatprep.subr.bf16.mxu0 0
        %1146 = vmatpush1.bf16.msra.mxu0 %v1127
        %1147 = vmatprep.subr.bf16.mxu0 0
        %1148 = vmatpush1.bf16.msra.mxu0 %v1128
        %1149 = vmatprep.subr.bf16.mxu0 0
        %1150 = vmatpush1.bf16.msra.mxu0 %v1129
        %1151 = vmatprep.subr.bf16.mxu0 0
        %1152 = vmatpush1.bf16.msra.mxu0 %v1130
        %1153 = vmatprep.subr.bf16.mxu0 0
        %1154 = vmatpush1.bf16.msra.mxu0 %v1131
        %1155 = vmatprep.subr.bf16.mxu0 0
        %1156 = vmatpush1.bf16.msra.mxu0 %v1132
        %1157 = vmatprep.subr.bf16.mxu0 0
        %1158 = vmatpush1.bf16.msra.mxu0 0
        %1159 = vmatprep.subr.bf16.mxu0 0
        %1160 = vmatpush1.bf16.msra.mxu0 0
        %1161 = vmatprep.subr.bf16.mxu0 0
        %1162 = vmatpush1.bf16.msra.mxu0 0
        %1163 = vmatprep.subr.bf16.mxu0 0
        %1164 = vmatpush1.bf16.msra.mxu0 0
        %1165 = vmatprep.subr.bf16.mxu0 0
        %1166 = vmatpush1.bf16.msra.mxu0 0
        %1167 = vmatprep.subr.bf16.mxu0 0
        %1168 = vmatpush1.bf16.msra.mxu0 0
        %1169 = vmatprep.subr.bf16.mxu0 0
        %1170 = vmatpush1.bf16.msra.mxu0 0
        %1171 = vmatprep.subr.bf16.mxu0 0
        %1172 = vmatpush1.bf16.msra.mxu0 0
        %1173 = vmatprep.mubr.bf16.mxu0 0
        %1174 = vmatmul.mubr.bf16.gmra.mrb[0].mxu0 %v1068
        %v1175 = vpop.f32.mrb[0].mxu0
        %v1176 = vadd.f32 %v1091, %v1175
        %v1177 = vpop.f32.mrb[0].mxu0
        %v1178 = vpop.f32.mrb[0].mxu0
        %v1179 = vadd.f32 %v1091, %v1178
        %v1180 = vpop.f32.mrb[0].mxu0
        %1181 = vmatprep.mubr.bf16.mxu0 0
        %1182 = vmatmul.mubr.bf16.gmra.mrb[0].mxu0 %v1069
        %v1183 = vpop.f32.mrb[0].mxu0
        %v1184 = vadd.f32 %v1091, %v1183
        %v1185 = vpop.f32.mrb[0].mxu0
        %v1186 = vpop.f32.mrb[0].mxu0
        %v1187 = vadd.f32 %v1091, %v1186
        %v1188 = vpop.f32.mrb[0].mxu0
        %1189 = vdwg.mxu0
        %1190 = vst [vmem:[#allocation2] sm:$0xff] %v1176
        %1191 = vst [vmem:[#allocation2 + $0x8] sm:$0xff] %v1179
        %1192 = vst [vmem:[#allocation2 + $0x10] sm:$0xff] %v1184
        %1193 = vst [vmem:[#allocation2 + $0x18] sm:$0xff] %v1187
        %p1194 = scmp.eq.s32.totalorder %s39, 1
        // Predicated region
        $region93: #{tpu_custom_call.1} parent=75 // pred_check
          %p1195 = pneg %p1194
        $region94: #{tpu_custom_call.1} parent=75 // pred_check_branch
          %1197 = sbr.rel (%p1195) target = $region96
        $region95: #{tpu_custom_call.1} parent=75 // pred_region
          %v1198 = vld [vmem:[#allocation2] sm:$0xff]
          %v1199 = vld [vmem:[#allocation2 + $0x8] sm:$0xff]
          %v1200 = vld [vmem:[#allocation2 + $0x10] sm:$0xff]
          %v1201 = vld [vmem:[#allocation2 + $0x18] sm:$0xff]
          %v1202 = vlaneseq
          %v1203 = vshrl.u32 %v1202, 7
          %v1204 = vadd.s32 %v1203, 8
          %vm1205 = vcmp.lt.s32.totalorder %v1203, 16
          %vm1206 = vcmp.lt.s32.totalorder %v1204, 16
          %v1207 = vsel %vm1205, 1, 0
          %v1208 = vsel %vm1206, 1, 0
          %v1209 = vcvt.s32.f32 %v1207
          %v1210 = vcvt.s32.f32 %v1208
          %v1211 = vmul.f32 %v1198, %v1209
          %v1212 = vmul.f32 %v1199, %v1210
          %v1213 = vmul.f32 %v1200, %v1209
          %v1214 = vmul.f32 %v1201, %v1210
          %v1215 = vadd.f32 %v1211, %v1212
          %v1216 = vrot.slane %v1215, 4
          %v1217 = vadd.f32 %v1215, %v1216
          %v1218 = vrot.slane %v1217, 2
          %v1219 = vadd.f32 %v1217, %v1218
          %v1220 = vrot.slane %v1219, 1
          %v1221 = vadd.f32 %v1219, %v1220
          %v1222 = vadd.f32 %v1213, %v1214
          %v1223 = vrot.slane %v1222, 4
          %v1224 = vadd.f32 %v1222, %v1223
          %v1225 = vrot.slane %v1224, 2
          %v1226 = vadd.f32 %v1224, %v1225
          %v1227 = vrot.slane %v1226, 1
          %v1228 = vadd.f32 %v1226, %v1227
          %v1229 = vmul.f32 %v1221, 0.0625
          %v1230 = vmul.f32 %v1228, 0.0625
          %v1231 = vld [vmem:[%s11] sm:$0x1]
          %v1233 = vlaneseq
          %v1234 = vshrl.u32 %v1233, 7
          %v1235 = vsub.s32 0, %v1234
          %v1236 = vrot.slane %v1231, %v1235
          %v1238 = vmul.f32 %v1229, %v1236
          %v1239 = vmul.f32 %v1230, %v1236
          %v1242 = vrot.slane %v1239, 7
          %vm1243 = vcmask 1041409
          %v1244 = vsel %vm1243, %v1242, %v1238
          %vm1246 = vcmask 1041408
          %v1247 = vsel %vm1246, %v1244, 0.0
          %1248 = vadd.xlane.f32.xlu0 %v1247
          %v1249 = vpop.xlane.xlu0 %1248
          %s1250 = sld [smem:[#allocation4]]
          %v1251 = vstv %s1250
          %v1252 = vadd.f32 %v1249, %v1251
          %vm1253 = vcmp.ge.f32.partialorder %v1252, 0.0
          %v1254 = vmul.f32 %v1252, 0.01
          %v1255 = vsel %vm1253, %v1252, %v1254
          %v1256 = vadd.f32 %v1255, 1.0
          %v1258 = vlaneseq
          %v1259 = vshrl.u32 %v1258, 7
          %v1260 = vsub.s32 0, %v1259
          %v1261 = vrot.slane %v1256, %v1260
          %v1262 = vlaneseq
          %v1263 = vshrl.u32 %v1262, 7
          %v1264 = vsub.s32 1, %v1263
          %v1265 = vrot.slane %v1256, %v1264
          %1268 = vst [vmem:[#allocation12] sm:$0x1] %v1261
          %1269 = vst [vmem:[#allocation12 + $0x1] sm:$0x1] %v1265
        $region96: #{tpu_custom_call.1} parent=75 // pred_fallthru
          _
        // Predicated region
        $region97: #{tpu_custom_call.1} parent=75 // pred_check
          %p1270 = pneg %p393
        $region98: #{tpu_custom_call.1} parent=75 // pred_check_branch
          %1272 = sbr.rel (%p1270) target = $region100
        $region99: #{tpu_custom_call.1} parent=75 // pred_region
          %s1273 = smul.u32 2, %s38
          %s1275 = ssub.s32 32, 32
          %1276 = vsyncadd [#allocation7], %s1275
          %s1277 = smul.addr %s1273, 16
          %s1278 = scalar_lea.hbm %s14, %s1277
          %s1279 = sshll.u32 [#allocation12], 4
          %s1280 = int_to_ptr.vmem [resolvable:$true] %s1279
          %1285 = dma.vmem_to_hbm [thread:$0]  %s1280, 32, %s1278, [#allocation7], 16, 16, 1
        $region100: #{tpu_custom_call.1} parent=75 // pred_fallthru
          _
        // Predicated region
        $region101: #{tpu_custom_call.1} parent=75 // pred_check
          %p1286 = pneg %p393
        $region102: #{tpu_custom_call.1} parent=75 // pred_check_branch
          %1288 = sbr.rel (%p1286) target = $region104
        $region103: #{tpu_custom_call.1} parent=75 // pred_region
          %1289 = dma.done [#allocation7], 32
        $region104: #{tpu_custom_call.1} parent=75 // pred_fallthru
          _
      $region76: #{tpu_custom_call.1} parent=5 // pred_fallthru
        _
      %p1290 = scmp.le.s32.totalorder 2, %s29
      // Predicated region
      $region105: #{tpu_custom_call.1} parent=5 // pred_check
        %p1291 = pneg %p1290
      $region106: #{tpu_custom_call.1} parent=5 // pred_check_branch
        %1293 = sbr.rel (%p1291) target = $region108
      $region107: #{tpu_custom_call.1} parent=5 // pred_region
        %s1294 = ssub.s32 %s29, 2
      $region108: #{tpu_custom_call.1} parent=5 // pred_fallthru
        _
    $region6: #{tpu_custom_call.1} parent=1 // loop_footer
      %s33 = sadd.s32 1, %s29
    $region7: #{tpu_custom_call.1} parent=1 // loop_footer_branch
      %28 = sbr.rel target = $region3
    $region8: #{tpu_custom_call.1} parent=1 // loop_exit
      _
    %1295 = vsyncpa [#allocation6], 1
    %s1296 = scalar_lea.sflag [#allocation6], 1
    %1297 = vsyncpa %s1296, 1
    %1298 = vsyncpa [#allocation10], 1
    %s1299 = scalar_lea.sflag [#allocation10], 1
    %1300 = vsyncpa %s1299, 1
    %1301 = vsyncpa [#allocation7], 1
    %s1302 = scalar_lea.sflag [#allocation7], 1
    %1303 = vsyncpa %s1302, 1
    %1304 = vsyncpa [#allocation8], 1
    %s1305 = scalar_lea.sflag [#allocation8], 1
    %1306 = vsyncpa %s1305, 1

</llo_original>
